<compile_context>
chip_gen: v6e
topology: v6e:2x2x1
jax: 0.10.0
libtpu: 0.0.40
codegen_flags: <defaults>
</compile_context>

<pallas_src>
import functools

import jax
import jax.numpy as jnp
from jax import lax
from jax.experimental import pallas as pl
from jax.experimental.pallas import tpu as pltpu


def _round_up(v, m):
    return ((v + m - 1) // m) * m


# ------------------- fused LayerNorm + conv1 + SiLU + conv2 + SiLU kernel -------------------
def _fused_block_kernel(x_ref, lnw_ref, lnb_ref, w1_ref, b1_ref, w2_ref, b2_ref, o_ref,
                        *, N, H, W, Cin, Cmid, Cout, Lin, L1, L2,
                        eps, normalize, compute_dtype):
    # x_ref   : (N, Cin, Lin)   zero-padded (pad=2), flattened (width W+4) samples
    # lnw_ref : (Cin, Lin) f32  LayerNorm gamma, zero on the pad ring / tail
    # lnb_ref : (Cin, Lin) f32  LayerNorm beta,  zero on the pad ring / tail
    # w1_ref  : (Cmid, 9*Cin)   conv1 weights, K index = (kh*3+kw)*Cin + cin
    # b1_ref  : (Cmid, 1) f32
    # w2_ref  : (Cout, 9*Cmid)  conv2 weights, K index = (kh*3+kw)*Cmid + c
    # b2_ref  : (Cout, 1) f32
    # o_ref   : (N, Cout, L2)   conv2+SiLU output on the flat (H x (W+4)) grid
    Wf = W + 4
    offs = [dy * Wf + dx for dy in range(3) for dx in range(3)]    # 3x3 taps as flat shifts

    def grid_mask(length, r_lo, r_hi, c_lo, c_hi):
        # 1.0 where flat index p = r*Wf + c has r in [r_lo, r_hi) and c in [c_lo, c_hi).
        # Built from iota in-kernel -> no mask input / DMA.  Float div is exact enough
        # (values << 2^24) for a correct floor.
        p = lax.broadcasted_iota(jnp.int32, (1, length), 1).astype(jnp.float32)
        r = jnp.floor(p / Wf)
        c = p - r * Wf
        keep = (r >= r_lo) & (r < r_hi) & (c >= c_lo) & (c < c_hi)
        return jnp.where(keep, 1.0, 0.0).astype(jnp.float32)

    # Conv1-output-domain mask: grid cell (r, c) holds conv1 output of original pixel
    # (r-1, c-1); keep r,c in [1, H+1) x [1, W+1) and zero the halo ring that conv2's
    # taps read -> this ring IS conv2's zero padding.
    mask1 = grid_mask(L1, 1, H + 1, 1, W + 1)
    if normalize:
        # Original-pixel mask on the input slab (rows/cols [2, H+2) x [2, W+2)) for a
        # numerically safer two-pass variance.
        mask_in = grid_mask(Lin, 2, H + 2, 2, W + 2)

    cnt = float(Cin * H * W)
    for n in range(N):                         # tiny static batch: one invocation total,
        xs = x_ref[n].astype(jnp.float32)      # no per-sample grid-step overhead.
        if normalize:
            mean = jnp.sum(xs) / cnt           # pad is zero -> full sum == interior sum
            d = (xs - mean) * mask_in          # centered, pad contributions removed
            var = jnp.sum(d * d) / cnt         # biased variance (PyTorch LayerNorm), 2-pass
            inv = lax.rsqrt(var + eps)
            # gamma/beta are zero on the pad ring -> ring normalizes to exactly 0,
            # which is conv1's zero padding.
            y = d * inv * lnw_ref[...] + lnb_ref[...]
        else:
            y = xs                             # wrapper padding already zero
        y = y.astype(compute_dtype)            # cast once (not once per tap)

        # ---- conv1: 9 taps folded into K -> ONE matmul (Cmid, 9*Cin) @ (9*Cin, L1) ----
        im1 = jnp.concatenate([y[:, o:o + L1] for o in offs], axis=0)
        a1 = jnp.dot(w1_ref[...], im1, preferred_element_type=jnp.float32) + b1_ref[...]
        h1 = (a1 * jax.nn.sigmoid(a1)) * mask1                 # SiLU, then zero halo ring
        h1 = h1.astype(compute_dtype)

        # ---- conv2: ONE matmul (Cout, 9*Cmid) @ (9*Cmid, L2) ----
        im2 = jnp.concatenate([h1[:, o:o + L2] for o in offs], axis=0)
        a2 = jnp.dot(w2_ref[...], im2, preferred_element_type=jnp.float32) + b2_ref[...]
        o_ref[n] = (a2 * jax.nn.sigmoid(a2)).astype(o_ref.dtype)


def my_block_forward(x_nchw, params, *, normalize=True, eps=1e-5,
                     compute_dtype=jnp.float32):
    N, Cin, H, W = x_nchw.shape
    Cmid = params["conv1_w"].shape[0]
    Cout = params["conv2_w"].shape[0]

    Wf = W + 4                          # flat width of the pad-2 spatial grid
    off_max = 2 * Wf + 2                # largest flat tap shift
    L2 = H * Wf                         # conv2 output slab (rows 0..H-1, full padded width)
    L1 = _round_up(L2 + off_max, 128)   # conv1/h1 slab: covers every lane conv2 reads
    Lin = _round_up(L1 + off_max, 128)  # input slab: covers every lane conv1 reads (>= (H+4)*Wf)

    def to_slab(a):
        # (..., H, W) -> pad spatially by 2 -> flatten (width Wf) -> zero-pad tail to Lin.
        pad2 = ((0, 0),) * (a.ndim - 2) + ((2, 2), (2, 2))
        a = jnp.pad(a, pad2)
        a = a.reshape(a.shape[:-2] + ((H + 4) * Wf,))
        tail = ((0, 0),) * (a.ndim - 1) + ((0, Lin - (H + 4) * Wf),)
        return jnp.pad(a, tail)

    # Input: NCHW is already channel-major / spatial-minor -> trailing-dim pad + reshape
    # only, no transpose.  Cast to compute_dtype so bf16 also halves the x DMA bytes.
    x_slab = to_slab(x_nchw).astype(compute_dtype)                  # (N, Cin, Lin)

    # LayerNorm affine params, zero-padded into the same slab layout (tiny, f32).
    lnw = to_slab(params["ln_w"].astype(jnp.float32))               # (Cin, Lin)
    lnb = to_slab(params["ln_b"].astype(jnp.float32))               # (Cin, Lin)

    # Conv weights OIHW -> (O, 9*I), K index = (kh*3+kw)*I + i (matches im2col row order).
    w1 = jnp.transpose(params["conv1_w"], (0, 2, 3, 1)).reshape(Cmid, 9 * Cin)
    w2 = jnp.transpose(params["conv2_w"], (0, 2, 3, 1)).reshape(Cout, 9 * Cmid)
    w1 = w1.astype(compute_dtype)
    w2 = w2.astype(compute_dtype)
    b1 = params["conv1_b"].reshape(Cmid, 1).astype(jnp.float32)
    b2 = params["conv2_b"].reshape(Cout, 1).astype(jnp.float32)

    kernel = functools.partial(
        _fused_block_kernel, N=N, H=H, W=W, Cin=Cin, Cmid=Cmid, Cout=Cout,
        Lin=Lin, L1=L1, L2=L2, eps=eps, normalize=normalize, compute_dtype=compute_dtype)

    out_slab = pl.pallas_call(
        kernel,
        out_shape=jax.ShapeDtypeStruct((N, Cout, L2), x_nchw.dtype),
        grid_spec=pltpu.PrefetchScalarGridSpec(
            num_scalar_prefetch=0,
            # Whole (tiny) batch in a single step: no per-sample grid overhead on the
            # single-TC v5e/v6e.  For large N on v7x, switch to a "parallel" batch axis.
            grid=(1,),
            in_specs=[
                pl.BlockSpec((N, Cin, Lin), lambda i: (0, 0, 0)),
                pl.BlockSpec((Cin, Lin), lambda i: (0, 0)),
                pl.BlockSpec((Cin, Lin), lambda i: (0, 0)),
                pl.BlockSpec((Cmid, 9 * Cin), lambda i: (0, 0)),
                pl.BlockSpec((Cmid, 1), lambda i: (0, 0)),
                pl.BlockSpec((Cout, 9 * Cmid), lambda i: (0, 0)),
                pl.BlockSpec((Cout, 1), lambda i: (0, 0)),
            ],
            out_specs=pl.BlockSpec((N, Cout, L2), lambda i: (0, 0, 0)),
        ),
        compiler_params=pltpu.CompilerParams(
            dimension_semantics=("arbitrary",)),
    )(x_slab, lnw, lnb, w1, b1, w2, b2)

    # (N, Cout, H*(W+4)) -> (N, Cout, H, W): trailing-dim reshape + slice, no transpose.
    return out_slab.reshape(N, Cout, H, Wf)[:, :, :, :W]


# ------------------------------------ pure-JAX reference ------------------------------------
def reference_forward(x, params, eps=1e-5):
    N = x.shape[0]
    xf = x.reshape(N, -1)
    mean = jnp.mean(xf, axis=-1).reshape(N, 1, 1, 1)
    var = jnp.var(xf, axis=-1).reshape(N, 1, 1, 1)
    ln = (x - mean) / jnp.sqrt(var + eps)
    ln = ln * params["ln_w"][None] + params["ln_b"][None]

    def conv(h, w, b):
        y = lax.conv_general_dilated(
            h, w, window_strides=(1, 1), padding=((1, 1), (1, 1)),
            dimension_numbers=("NCHW", "OIHW", "NCHW"))
        return y + b.reshape(1, -1, 1, 1)

    silu = lambda v: v * jax.nn.sigmoid(v)
    h = silu(conv(ln, params["conv1_w"], params["conv1_b"]))
    h = silu(conv(h, params["conv2_w"], params["conv2_b"]))
    return h


if __name__ == "__main__":
    N, Cin, Cout, H, W = 2, 4, 8, 16, 16
    key = jax.random.PRNGKey(0)
    k = jax.random.split(key, 7)
    x = jax.random.normal(k[0], (N, Cin, H, W), jnp.float32)
    params = {
        "ln_w": 1.0 + 0.1 * jax.random.normal(k[1], (Cin, H, W), jnp.float32),
        "ln_b": 0.1 * jax.random.normal(k[2], (Cin, H, W), jnp.float32),
        "conv1_w": 0.1 * jax.random.normal(k[3], (Cout, Cin, 3, 3), jnp.float32),
        "conv1_b": 0.1 * jax.random.normal(k[4], (Cout,), jnp.float32),
        "conv2_w": 0.1 * jax.random.normal(k[5], (Cout, Cout, 3, 3), jnp.float32),
        "conv2_b": 0.1 * jax.random.normal(k[6], (Cout,), jnp.float32),
    }

    ref = reference_forward(x, params)

    # f32 MXU path: strict check against the reference.
    out = jax.block_until_ready(jax.jit(my_block_forward)(x, params))
    assert out.shape == (N, Cout, H, W), out.shape
    max_err = float(jnp.max(jnp.abs(out - ref)))
    assert jnp.allclose(out, ref, atol=2e-3, rtol=2e-3), max_err

    # bf16 MXU path (halves MXU/DMA cost for x and weights); loose check.
    fwd_bf16 = jax.jit(functools.partial(my_block_forward, compute_dtype=jnp.bfloat16))
    out_bf16 = jax.block_until_ready(fwd_bf16(x, params))
    max_err_bf16 = float(jnp.max(jnp.abs(out_bf16 - ref)))
    assert jnp.allclose(out_bf16, ref, atol=2e-1, rtol=2e-1), max_err_bf16

    print("KERNEL_OK")
</pallas_src>

<mosaic_0001>
module attributes {stable_mosaic.version = 11 : i64} {
  func.func @_fused_block_kernel(%arg0: i32, %arg1: memref<2x4x512xf32, #tpu.memory_space<vmem>>, %arg2: memref<4x512xf32, #tpu.memory_space<vmem>>, %arg3: memref<4x512xf32, #tpu.memory_space<vmem>>, %arg4: memref<8x36xf32, #tpu.memory_space<vmem>>, %arg5: memref<8x1xf32, #tpu.memory_space<vmem>>, %arg6: memref<8x72xf32, #tpu.memory_space<vmem>>, %arg7: memref<8x1xf32, #tpu.memory_space<vmem>>, %arg8: memref<2x8x320xf32, #tpu.memory_space<vmem>>) attributes {dimension_semantics = [#tpu.dimension_semantics<arbitrary>], iteration_bounds = array<i64: 1>, scalar_prefetch = 0 : i64, scratch_operands = 0 : i64, tpu.core_type = #tpu.core_type<tc>, window_params = [{pipeline_mode = #tpu.pipeline_mode<synchronous>, transform_indices = @transform_0, window_bounds = array<i64: 2, 4, 512>}, {pipeline_mode = #tpu.pipeline_mode<synchronous>, transform_indices = @transform_1, window_bounds = array<i64: 4, 512>}, {pipeline_mode = #tpu.pipeline_mode<synchronous>, transform_indices = @transform_2, window_bounds = array<i64: 4, 512>}, {pipeline_mode = #tpu.pipeline_mode<synchronous>, transform_indices = @transform_3, window_bounds = array<i64: 8, 36>}, {pipeline_mode = #tpu.pipeline_mode<synchronous>, transform_indices = @transform_4, window_bounds = array<i64: 8, 1>}, {pipeline_mode = #tpu.pipeline_mode<synchronous>, transform_indices = @transform_5, window_bounds = array<i64: 8, 72>}, {pipeline_mode = #tpu.pipeline_mode<synchronous>, transform_indices = @transform_6, window_bounds = array<i64: 8, 1>}, {pipeline_mode = #tpu.pipeline_mode<synchronous>, transform_indices = @transform_7, window_bounds = array<i64: 2, 8, 320>}]} {
    %0 = tpu.iota {dimensions = array<i32: 1>} : vector<1x384xi32>
    %1 = arith.sitofp %0 : vector<1x384xi32> to vector<1x384xf32>
    %cst = arith.constant 2.000000e+01 : f32
    %2 = vector.broadcast %cst : f32 to vector<1x384xf32>
    %3 = arith.divf %1, %2 : vector<1x384xf32>
    %4 = math.floor %3 : vector<1x384xf32>
    %cst_0 = arith.constant 2.000000e+01 : f32
    %5 = vector.broadcast %cst_0 : f32 to vector<1x384xf32>
    %6 = arith.mulf %4, %5 : vector<1x384xf32>
    %7 = arith.subf %1, %6 : vector<1x384xf32>
    %cst_1 = arith.constant 1.000000e+00 : f32
    %8 = vector.broadcast %cst_1 : f32 to vector<1x384xf32>
    %9 = arith.cmpf oge, %4, %8 : vector<1x384xf32>
    %cst_2 = arith.constant 1.700000e+01 : f32
    %10 = vector.broadcast %cst_2 : f32 to vector<1x384xf32>
    %11 = arith.cmpf olt, %4, %10 : vector<1x384xf32>
    %12 = arith.andi %9, %11 : vector<1x384xi1>
    %cst_3 = arith.constant 1.000000e+00 : f32
    %13 = vector.broadcast %cst_3 : f32 to vector<1x384xf32>
    %14 = arith.cmpf oge, %7, %13 : vector<1x384xf32>
    %15 = arith.andi %12, %14 : vector<1x384xi1>
    %cst_4 = arith.constant 1.700000e+01 : f32
    %16 = vector.broadcast %cst_4 : f32 to vector<1x384xf32>
    %17 = arith.cmpf olt, %7, %16 : vector<1x384xf32>
    %18 = arith.andi %15, %17 : vector<1x384xi1>
    %cst_5 = arith.constant 1.000000e+00 : f32
    %cst_6 = arith.constant 0.000000e+00 : f32
    %19 = vector.broadcast %cst_5 : f32 to vector<1x384xf32>
    %20 = vector.broadcast %cst_6 : f32 to vector<1x384xf32>
    %21 = arith.select %18, %19, %20 : vector<1x384xi1>, vector<1x384xf32>
    %22 = tpu.iota {dimensions = array<i32: 1>} : vector<1x512xi32>
    %23 = arith.sitofp %22 : vector<1x512xi32> to vector<1x512xf32>
    %cst_7 = arith.constant 2.000000e+01 : f32
    %24 = vector.broadcast %cst_7 : f32 to vector<1x512xf32>
    %25 = arith.divf %23, %24 : vector<1x512xf32>
    %26 = math.floor %25 : vector<1x512xf32>
    %cst_8 = arith.constant 2.000000e+01 : f32
    %27 = vector.broadcast %cst_8 : f32 to vector<1x512xf32>
    %28 = arith.mulf %26, %27 : vector<1x512xf32>
    %29 = arith.subf %23, %28 : vector<1x512xf32>
    %cst_9 = arith.constant 2.000000e+00 : f32
    %30 = vector.broadcast %cst_9 : f32 to vector<1x512xf32>
    %31 = arith.cmpf oge, %26, %30 : vector<1x512xf32>
    %cst_10 = arith.constant 1.800000e+01 : f32
    %32 = vector.broadcast %cst_10 : f32 to vector<1x512xf32>
    %33 = arith.cmpf olt, %26, %32 : vector<1x512xf32>
    %34 = arith.andi %31, %33 : vector<1x512xi1>
    %cst_11 = arith.constant 2.000000e+00 : f32
    %35 = vector.broadcast %cst_11 : f32 to vector<1x512xf32>
    %36 = arith.cmpf oge, %29, %35 : vector<1x512xf32>
    %37 = arith.andi %34, %36 : vector<1x512xi1>
    %cst_12 = arith.constant 1.800000e+01 : f32
    %38 = vector.broadcast %cst_12 : f32 to vector<1x512xf32>
    %39 = arith.cmpf olt, %29, %38 : vector<1x512xf32>
    %40 = arith.andi %37, %39 : vector<1x512xi1>
    %cst_13 = arith.constant 1.000000e+00 : f32
    %cst_14 = arith.constant 0.000000e+00 : f32
    %41 = vector.broadcast %cst_13 : f32 to vector<1x512xf32>
    %42 = vector.broadcast %cst_14 : f32 to vector<1x512xf32>
    %43 = arith.select %40, %41, %42 : vector<1x512xi1>, vector<1x512xf32>
    %c0 = arith.constant 0 : index
    %c0_15 = arith.constant 0 : index
    %c0_16 = arith.constant 0 : index
    %44 = vector.load %arg1[%c0, %c0_15, %c0_16] : memref<2x4x512xf32, #tpu.memory_space<vmem>>, vector<1x4x512xf32>
    %45 = vector.shape_cast %44 : vector<1x4x512xf32> to vector<4x512xf32>
    %46 = vector.shape_cast %45 : vector<4x512xf32> to vector<1x4x512xf32>
    %cst_17 = arith.constant dense<0.000000e+00> : vector<1xf32>
    %47 = vector.multi_reduction <add>, %46, %cst_17 [1, 2] : vector<1x4x512xf32> to vector<1xf32>
    %48 = vector.shape_cast %47 : vector<1xf32> to vector<1x1x1xf32>
    %49 = vector.extract %48[0, 0, 0] : f32 from vector<1x1x1xf32>
    %cst_18 = arith.constant 1.024000e+03 : f32
    %50 = arith.divf %49, %cst_18 : f32
    %51 = vector.broadcast %50 : f32 to vector<4x512xf32>
    %52 = arith.subf %45, %51 : vector<4x512xf32>
    %53 = vector.broadcast %43 : vector<1x512xf32> to vector<4x512xf32>
    %54 = arith.mulf %52, %53 : vector<4x512xf32>
    %55 = arith.mulf %54, %54 : vector<4x512xf32>
    %56 = vector.shape_cast %55 : vector<4x512xf32> to vector<1x4x512xf32>
    %cst_19 = arith.constant dense<0.000000e+00> : vector<1xf32>
    %57 = vector.multi_reduction <add>, %56, %cst_19 [1, 2] : vector<1x4x512xf32> to vector<1xf32>
    %58 = vector.shape_cast %57 : vector<1xf32> to vector<1x1x1xf32>
    %59 = vector.extract %58[0, 0, 0] : f32 from vector<1x1x1xf32>
    %cst_20 = arith.constant 1.024000e+03 : f32
    %60 = arith.divf %59, %cst_20 : f32
    %cst_21 = arith.constant 9.99999974E-6 : f32
    %61 = arith.addf %60, %cst_21 : f32
    %62 = math.rsqrt %61 : f32
    %63 = vector.broadcast %62 : f32 to vector<4x512xf32>
    %64 = arith.mulf %54, %63 : vector<4x512xf32>
    %c0_22 = arith.constant 0 : index
    %c0_23 = arith.constant 0 : index
    %65 = vector.load %arg2[%c0_22, %c0_23] : memref<4x512xf32, #tpu.memory_space<vmem>>, vector<4x512xf32>
    %66 = arith.mulf %64, %65 : vector<4x512xf32>
    %c0_24 = arith.constant 0 : index
    %c0_25 = arith.constant 0 : index
    %67 = vector.load %arg3[%c0_24, %c0_25] : memref<4x512xf32, #tpu.memory_space<vmem>>, vector<4x512xf32>
    %68 = arith.addf %66, %67 : vector<4x512xf32>
    %69 = vector.extract_strided_slice %68 {offsets = [0, 0], sizes = [4, 384], strides = [1, 1]} : vector<4x512xf32> to vector<4x384xf32>
    %70 = vector.extract_strided_slice %68 {offsets = [0, 1], sizes = [4, 384], strides = [1, 1]} : vector<4x512xf32> to vector<4x384xf32>
    %71 = vector.extract_strided_slice %68 {offsets = [0, 2], sizes = [4, 384], strides = [1, 1]} : vector<4x512xf32> to vector<4x384xf32>
    %72 = vector.extract_strided_slice %68 {offsets = [0, 20], sizes = [4, 384], strides = [1, 1]} : vector<4x512xf32> to vector<4x384xf32>
    %73 = vector.extract_strided_slice %68 {offsets = [0, 21], sizes = [4, 384], strides = [1, 1]} : vector<4x512xf32> to vector<4x384xf32>
    %74 = vector.extract_strided_slice %68 {offsets = [0, 22], sizes = [4, 384], strides = [1, 1]} : vector<4x512xf32> to vector<4x384xf32>
    %75 = vector.extract_strided_slice %68 {offsets = [0, 40], sizes = [4, 384], strides = [1, 1]} : vector<4x512xf32> to vector<4x384xf32>
    %76 = vector.extract_strided_slice %68 {offsets = [0, 41], sizes = [4, 384], strides = [1, 1]} : vector<4x512xf32> to vector<4x384xf32>
    %77 = vector.extract_strided_slice %68 {offsets = [0, 42], sizes = [4, 384], strides = [1, 1]} : vector<4x512xf32> to vector<4x384xf32>
    %78 = tpu.concatenate %69, %70, %71, %72, %73, %74, %75, %76, %77 in 0 : vector<4x384xf32>, vector<4x384xf32>, vector<4x384xf32>, vector<4x384xf32>, vector<4x384xf32>, vector<4x384xf32>, vector<4x384xf32>, vector<4x384xf32>, vector<4x384xf32> -> vector<36x384xf32>
    %c0_26 = arith.constant 0 : index
    %c0_27 = arith.constant 0 : index
    %79 = vector.load %arg4[%c0_26, %c0_27] : memref<8x36xf32, #tpu.memory_space<vmem>>, vector<8x36xf32>
    %cst_28 = arith.constant dense<0.000000e+00> : vector<8x384xf32>
    %80 = tpu.matmul %79, %78, %cst_28 {dimension_numbers = #tpu.dot_dimension_numbers<[1], [0], [0], [1], [0, 0, 1, 1], [], []>} : vector<8x36xf32>, vector<36x384xf32>, vector<8x384xf32> -> vector<8x384xf32>
    %c0_29 = arith.constant 0 : index
    %c0_30 = arith.constant 0 : index
    %81 = vector.load %arg5[%c0_29, %c0_30] : memref<8x1xf32, #tpu.memory_space<vmem>>, vector<8x1xf32>
    %82 = vector.broadcast %81 : vector<8x1xf32> to vector<8x384xf32>
    %83 = arith.addf %80, %82 : vector<8x384xf32>
    %84 = arith.negf %83 : vector<8x384xf32>
    %85 = math.exp %84 : vector<8x384xf32>
    %cst_31 = arith.constant 1.000000e+00 : f32
    %86 = vector.broadcast %cst_31 : f32 to vector<8x384xf32>
    %87 = arith.addf %86, %85 : vector<8x384xf32>
    %88 = arith.divf %86, %87 : vector<8x384xf32>
    %89 = arith.mulf %83, %88 : vector<8x384xf32>
    %90 = vector.broadcast %21 : vector<1x384xf32> to vector<8x384xf32>
    %91 = arith.mulf %89, %90 : vector<8x384xf32>
    %92 = vector.extract_strided_slice %91 {offsets = [0, 0], sizes = [8, 320], strides = [1, 1]} : vector<8x384xf32> to vector<8x320xf32>
    %93 = vector.extract_strided_slice %91 {offsets = [0, 1], sizes = [8, 320], strides = [1, 1]} : vector<8x384xf32> to vector<8x320xf32>
    %94 = vector.extract_strided_slice %91 {offsets = [0, 2], sizes = [8, 320], strides = [1, 1]} : vector<8x384xf32> to vector<8x320xf32>
    %95 = vector.extract_strided_slice %91 {offsets = [0, 20], sizes = [8, 320], strides = [1, 1]} : vector<8x384xf32> to vector<8x320xf32>
    %96 = vector.extract_strided_slice %91 {offsets = [0, 21], sizes = [8, 320], strides = [1, 1]} : vector<8x384xf32> to vector<8x320xf32>
    %97 = vector.extract_strided_slice %91 {offsets = [0, 22], sizes = [8, 320], strides = [1, 1]} : vector<8x384xf32> to vector<8x320xf32>
    %98 = vector.extract_strided_slice %91 {offsets = [0, 40], sizes = [8, 320], strides = [1, 1]} : vector<8x384xf32> to vector<8x320xf32>
    %99 = vector.extract_strided_slice %91 {offsets = [0, 41], sizes = [8, 320], strides = [1, 1]} : vector<8x384xf32> to vector<8x320xf32>
    %100 = vector.extract_strided_slice %91 {offsets = [0, 42], sizes = [8, 320], strides = [1, 1]} : vector<8x384xf32> to vector<8x320xf32>
    %101 = tpu.concatenate %92, %93, %94, %95, %96, %97, %98, %99, %100 in 0 : vector<8x320xf32>, vector<8x320xf32>, vector<8x320xf32>, vector<8x320xf32>, vector<8x320xf32>, vector<8x320xf32>, vector<8x320xf32>, vector<8x320xf32>, vector<8x320xf32> -> vector<72x320xf32>
    %c0_32 = arith.constant 0 : index
    %c0_33 = arith.constant 0 : index
    %102 = vector.load %arg6[%c0_32, %c0_33] : memref<8x72xf32, #tpu.memory_space<vmem>>, vector<8x72xf32>
    %cst_34 = arith.constant dense<0.000000e+00> : vector<8x320xf32>
    %103 = tpu.matmul %102, %101, %cst_34 {dimension_numbers = #tpu.dot_dimension_numbers<[1], [0], [0], [1], [0, 0, 1, 1], [], []>} : vector<8x72xf32>, vector<72x320xf32>, vector<8x320xf32> -> vector<8x320xf32>
    %c0_35 = arith.constant 0 : index
    %c0_36 = arith.constant 0 : index
    %104 = vector.load %arg7[%c0_35, %c0_36] : memref<8x1xf32, #tpu.memory_space<vmem>>, vector<8x1xf32>
    %105 = vector.broadcast %104 : vector<8x1xf32> to vector<8x320xf32>
    %106 = arith.addf %103, %105 : vector<8x320xf32>
    %107 = arith.negf %106 : vector<8x320xf32>
    %108 = math.exp %107 : vector<8x320xf32>
    %cst_37 = arith.constant 1.000000e+00 : f32
    %109 = vector.broadcast %cst_37 : f32 to vector<8x320xf32>
    %110 = arith.addf %109, %108 : vector<8x320xf32>
    %111 = arith.divf %109, %110 : vector<8x320xf32>
    %112 = arith.mulf %106, %111 : vector<8x320xf32>
    %c0_38 = arith.constant 0 : index
    %c0_39 = arith.constant 0 : index
    %c0_40 = arith.constant 0 : index
    %113 = vector.load %arg8[%c0_38, %c0_39, %c0_40] : memref<2x8x320xf32, #tpu.memory_space<vmem>>, vector<1x8x320xf32>
    %114 = vector.shape_cast %113 : vector<1x8x320xf32> to vector<8x320xf32>
    %115 = vector.shape_cast %112 : vector<8x320xf32> to vector<1x8x320xf32>
    tpu.vector_store %arg8[%c0_38, %c0_39, %c0_40], %115 {strides = array<i32>} : memref<2x8x320xf32, #tpu.memory_space<vmem>>, vector<1x8x320xf32>,
    %c1 = arith.constant 1 : index
    %c0_41 = arith.constant 0 : index
    %c0_42 = arith.constant 0 : index
    %116 = vector.load %arg1[%c1, %c0_41, %c0_42] : memref<2x4x512xf32, #tpu.memory_space<vmem>>, vector<1x4x512xf32>
    %117 = vector.shape_cast %116 : vector<1x4x512xf32> to vector<4x512xf32>
    %118 = vector.shape_cast %117 : vector<4x512xf32> to vector<1x4x512xf32>
    %cst_43 = arith.constant dense<0.000000e+00> : vector<1xf32>
    %119 = vector.multi_reduction <add>, %118, %cst_43 [1, 2] : vector<1x4x512xf32> to vector<1xf32>
    %120 = vector.shape_cast %119 : vector<1xf32> to vector<1x1x1xf32>
    %121 = vector.extract %120[0, 0, 0] : f32 from vector<1x1x1xf32>
    %cst_44 = arith.constant 1.024000e+03 : f32
    %122 = arith.divf %121, %cst_44 : f32
    %123 = vector.broadcast %122 : f32 to vector<4x512xf32>
    %124 = arith.subf %117, %123 : vector<4x512xf32>
    %125 = vector.broadcast %43 : vector<1x512xf32> to vector<4x512xf32>
    %126 = arith.mulf %124, %125 : vector<4x512xf32>
    %127 = arith.mulf %126, %126 : vector<4x512xf32>
    %128 = vector.shape_cast %127 : vector<4x512xf32> to vector<1x4x512xf32>
    %cst_45 = arith.constant dense<0.000000e+00> : vector<1xf32>
    %129 = vector.multi_reduction <add>, %128, %cst_45 [1, 2] : vector<1x4x512xf32> to vector<1xf32>
    %130 = vector.shape_cast %129 : vector<1xf32> to vector<1x1x1xf32>
    %131 = vector.extract %130[0, 0, 0] : f32 from vector<1x1x1xf32>
    %cst_46 = arith.constant 1.024000e+03 : f32
    %132 = arith.divf %131, %cst_46 : f32
    %cst_47 = arith.constant 9.99999974E-6 : f32
    %133 = arith.addf %132, %cst_47 : f32
    %134 = math.rsqrt %133 : f32
    %135 = vector.broadcast %134 : f32 to vector<4x512xf32>
    %136 = arith.mulf %126, %135 : vector<4x512xf32>
    %c0_48 = arith.constant 0 : index
    %c0_49 = arith.constant 0 : index
    %137 = vector.load %arg2[%c0_48, %c0_49] : memref<4x512xf32, #tpu.memory_space<vmem>>, vector<4x512xf32>
    %138 = arith.mulf %136, %137 : vector<4x512xf32>
    %c0_50 = arith.constant 0 : index
    %c0_51 = arith.constant 0 : index
    %139 = vector.load %arg3[%c0_50, %c0_51] : memref<4x512xf32, #tpu.memory_space<vmem>>, vector<4x512xf32>
    %140 = arith.addf %138, %139 : vector<4x512xf32>
    %141 = vector.extract_strided_slice %140 {offsets = [0, 0], sizes = [4, 384], strides = [1, 1]} : vector<4x512xf32> to vector<4x384xf32>
    %142 = vector.extract_strided_slice %140 {offsets = [0, 1], sizes = [4, 384], strides = [1, 1]} : vector<4x512xf32> to vector<4x384xf32>
    %143 = vector.extract_strided_slice %140 {offsets = [0, 2], sizes = [4, 384], strides = [1, 1]} : vector<4x512xf32> to vector<4x384xf32>
    %144 = vector.extract_strided_slice %140 {offsets = [0, 20], sizes = [4, 384], strides = [1, 1]} : vector<4x512xf32> to vector<4x384xf32>
    %145 = vector.extract_strided_slice %140 {offsets = [0, 21], sizes = [4, 384], strides = [1, 1]} : vector<4x512xf32> to vector<4x384xf32>
    %146 = vector.extract_strided_slice %140 {offsets = [0, 22], sizes = [4, 384], strides = [1, 1]} : vector<4x512xf32> to vector<4x384xf32>
    %147 = vector.extract_strided_slice %140 {offsets = [0, 40], sizes = [4, 384], strides = [1, 1]} : vector<4x512xf32> to vector<4x384xf32>
    %148 = vector.extract_strided_slice %140 {offsets = [0, 41], sizes = [4, 384], strides = [1, 1]} : vector<4x512xf32> to vector<4x384xf32>
    %149 = vector.extract_strided_slice %140 {offsets = [0, 42], sizes = [4, 384], strides = [1, 1]} : vector<4x512xf32> to vector<4x384xf32>
    %150 = tpu.concatenate %141, %142, %143, %144, %145, %146, %147, %148, %149 in 0 : vector<4x384xf32>, vector<4x384xf32>, vector<4x384xf32>, vector<4x384xf32>, vector<4x384xf32>, vector<4x384xf32>, vector<4x384xf32>, vector<4x384xf32>, vector<4x384xf32> -> vector<36x384xf32>
    %c0_52 = arith.constant 0 : index
    %c0_53 = arith.constant 0 : index
    %151 = vector.load %arg4[%c0_52, %c0_53] : memref<8x36xf32, #tpu.memory_space<vmem>>, vector<8x36xf32>
    %cst_54 = arith.constant dense<0.000000e+00> : vector<8x384xf32>
    %152 = tpu.matmul %151, %150, %cst_54 {dimension_numbers = #tpu.dot_dimension_numbers<[1], [0], [0], [1], [0, 0, 1, 1], [], []>} : vector<8x36xf32>, vector<36x384xf32>, vector<8x384xf32> -> vector<8x384xf32>
    %c0_55 = arith.constant 0 : index
    %c0_56 = arith.constant 0 : index
    %153 = vector.load %arg5[%c0_55, %c0_56] : memref<8x1xf32, #tpu.memory_space<vmem>>, vector<8x1xf32>
    %154 = vector.broadcast %153 : vector<8x1xf32> to vector<8x384xf32>
    %155 = arith.addf %152, %154 : vector<8x384xf32>
    %156 = arith.negf %155 : vector<8x384xf32>
    %157 = math.exp %156 : vector<8x384xf32>
    %cst_57 = arith.constant 1.000000e+00 : f32
    %158 = vector.broadcast %cst_57 : f32 to vector<8x384xf32>
    %159 = arith.addf %158, %157 : vector<8x384xf32>
    %160 = arith.divf %158, %159 : vector<8x384xf32>
    %161 = arith.mulf %155, %160 : vector<8x384xf32>
    %162 = vector.broadcast %21 : vector<1x384xf32> to vector<8x384xf32>
    %163 = arith.mulf %161, %162 : vector<8x384xf32>
    %164 = vector.extract_strided_slice %163 {offsets = [0, 0], sizes = [8, 320], strides = [1, 1]} : vector<8x384xf32> to vector<8x320xf32>
    %165 = vector.extract_strided_slice %163 {offsets = [0, 1], sizes = [8, 320], strides = [1, 1]} : vector<8x384xf32> to vector<8x320xf32>
    %166 = vector.extract_strided_slice %163 {offsets = [0, 2], sizes = [8, 320], strides = [1, 1]} : vector<8x384xf32> to vector<8x320xf32>
    %167 = vector.extract_strided_slice %163 {offsets = [0, 20], sizes = [8, 320], strides = [1, 1]} : vector<8x384xf32> to vector<8x320xf32>
    %168 = vector.extract_strided_slice %163 {offsets = [0, 21], sizes = [8, 320], strides = [1, 1]} : vector<8x384xf32> to vector<8x320xf32>
    %169 = vector.extract_strided_slice %163 {offsets = [0, 22], sizes = [8, 320], strides = [1, 1]} : vector<8x384xf32> to vector<8x320xf32>
    %170 = vector.extract_strided_slice %163 {offsets = [0, 40], sizes = [8, 320], strides = [1, 1]} : vector<8x384xf32> to vector<8x320xf32>
    %171 = vector.extract_strided_slice %163 {offsets = [0, 41], sizes = [8, 320], strides = [1, 1]} : vector<8x384xf32> to vector<8x320xf32>
    %172 = vector.extract_strided_slice %163 {offsets = [0, 42], sizes = [8, 320], strides = [1, 1]} : vector<8x384xf32> to vector<8x320xf32>
    %173 = tpu.concatenate %164, %165, %166, %167, %168, %169, %170, %171, %172 in 0 : vector<8x320xf32>, vector<8x320xf32>, vector<8x320xf32>, vector<8x320xf32>, vector<8x320xf32>, vector<8x320xf32>, vector<8x320xf32>, vector<8x320xf32>, vector<8x320xf32> -> vector<72x320xf32>
    %c0_58 = arith.constant 0 : index
    %c0_59 = arith.constant 0 : index
    %174 = vector.load %arg6[%c0_58, %c0_59] : memref<8x72xf32, #tpu.memory_space<vmem>>, vector<8x72xf32>
    %cst_60 = arith.constant dense<0.000000e+00> : vector<8x320xf32>
    %175 = tpu.matmul %174, %173, %cst_60 {dimension_numbers = #tpu.dot_dimension_numbers<[1], [0], [0], [1], [0, 0, 1, 1], [], []>} : vector<8x72xf32>, vector<72x320xf32>, vector<8x320xf32> -> vector<8x320xf32>
    %c0_61 = arith.constant 0 : index
    %c0_62 = arith.constant 0 : index
    %176 = vector.load %arg7[%c0_61, %c0_62] : memref<8x1xf32, #tpu.memory_space<vmem>>, vector<8x1xf32>
    %177 = vector.broadcast %176 : vector<8x1xf32> to vector<8x320xf32>
    %178 = arith.addf %175, %177 : vector<8x320xf32>
    %179 = arith.negf %178 : vector<8x320xf32>
    %180 = math.exp %179 : vector<8x320xf32>
    %cst_63 = arith.constant 1.000000e+00 : f32
    %181 = vector.broadcast %cst_63 : f32 to vector<8x320xf32>
    %182 = arith.addf %181, %180 : vector<8x320xf32>
    %183 = arith.divf %181, %182 : vector<8x320xf32>
    %184 = arith.mulf %178, %183 : vector<8x320xf32>
    %c1_64 = arith.constant 1 : index
    %c0_65 = arith.constant 0 : index
    %c0_66 = arith.constant 0 : index
    %185 = vector.load %arg8[%c1_64, %c0_65, %c0_66] : memref<2x8x320xf32, #tpu.memory_space<vmem>>, vector<1x8x320xf32>
    %186 = vector.shape_cast %185 : vector<1x8x320xf32> to vector<8x320xf32>
    %187 = vector.shape_cast %184 : vector<8x320xf32> to vector<1x8x320xf32>
    tpu.vector_store %arg8[%c1_64, %c0_65, %c0_66], %187 {strides = array<i32>} : memref<2x8x320xf32, #tpu.memory_space<vmem>>, vector<1x8x320xf32>,
    return
  }
  func.func @transform_0(%arg0: i32) -> (i32, i32, i32) {
    %c0_i32 = arith.constant 0 : i32
    %c0_i32_0 = arith.constant 0 : i32
    %c0_i32_1 = arith.constant 0 : i32
    %c0_i32_2 = arith.constant 0 : i32
    return %c0_i32, %c0_i32_0, %c0_i32_1 : i32, i32, i32
  }
  func.func @transform_1(%arg0: i32) -> (i32, i32) {
    %c0_i32 = arith.constant 0 : i32
    %c0_i32_0 = arith.constant 0 : i32
    %c0_i32_1 = arith.constant 0 : i32
    return %c0_i32, %c0_i32_0 : i32, i32
  }
  func.func @transform_2(%arg0: i32) -> (i32, i32) {
    %c0_i32 = arith.constant 0 : i32
    %c0_i32_0 = arith.constant 0 : i32
    %c0_i32_1 = arith.constant 0 : i32
    return %c0_i32, %c0_i32_0 : i32, i32
  }
  func.func @transform_3(%arg0: i32) -> (i32, i32) {
    %c0_i32 = arith.constant 0 : i32
    %c0_i32_0 = arith.constant 0 : i32
    %c0_i32_1 = arith.constant 0 : i32
    return %c0_i32, %c0_i32_0 : i32, i32
  }
  func.func @transform_4(%arg0: i32) -> (i32, i32) {
    %c0_i32 = arith.constant 0 : i32
    %c0_i32_0 = arith.constant 0 : i32
    %c0_i32_1 = arith.constant 0 : i32
    return %c0_i32, %c0_i32_0 : i32, i32
  }
  func.func @transform_5(%arg0: i32) -> (i32, i32) {
    %c0_i32 = arith.constant 0 : i32
    %c0_i32_0 = arith.constant 0 : i32
    %c0_i32_1 = arith.constant 0 : i32
    return %c0_i32, %c0_i32_0 : i32, i32
  }
  func.func @transform_6(%arg0: i32) -> (i32, i32) {
    %c0_i32 = arith.constant 0 : i32
    %c0_i32_0 = arith.constant 0 : i32
    %c0_i32_1 = arith.constant 0 : i32
    return %c0_i32, %c0_i32_0 : i32, i32
  }
  func.func @transform_7(%arg0: i32) -> (i32, i32, i32) {
    %c0_i32 = arith.constant 0 : i32
    %c0_i32_0 = arith.constant 0 : i32
    %c0_i32_1 = arith.constant 0 : i32
    %c0_i32_2 = arith.constant 0 : i32
    return %c0_i32, %c0_i32_0, %c0_i32_1 : i32, i32, i32
  }
}

</mosaic_0001>

<llo_original>
// kernel: my_block_forward.1
$region0: #{my_block_forward.1}
  #allocation0 [shape = 'u32[]', space=smem, size = 0x4, offset = 0x4, fixed_abs, tag = 'smem constant byte address 0x4 - core index']
  #allocation1 [shape = 'u32[144,128]{1,0:T(1,128)}', space=vmem, size = 0x12000, scoped, tag = 'internal scratch']
  %s0 = inlined_call_operand.vmem [shape: f32[2,4,512], index: 0, kind: input, shape index: {}]
  %s1 = inlined_call_operand.vmem [shape: f32[4,512], index: 1, kind: input, shape index: {}]
  %s2 = inlined_call_operand.vmem [shape: f32[4,512], index: 2, kind: input, shape index: {}]
  %s3 = inlined_call_operand.vmem [shape: f32[8,36], index: 3, kind: input, shape index: {}]
  %s4 = inlined_call_operand.vmem [shape: f32[8,1], index: 4, kind: input, shape index: {}]
  %s5 = inlined_call_operand.vmem [shape: f32[8,72], index: 5, kind: input, shape index: {}]
  %s6 = inlined_call_operand.vmem [shape: f32[8,1], index: 6, kind: input, shape index: {}]
  %s7 = inlined_call_operand.vmem [shape: f32[2,8,320], index: 7, kind: output, shape index: {}]
  %s8 = sld [smem:[#allocation0]]
  $region38: #{my_block_forward.1} parent=0
    _
  %s10 = ssub.s32 1, %s8
  %s11 = scalar_select 0, %s10, %s8
  // Predicated region
  $region2: #{my_block_forward.1} parent=0 // pred_check
    _
  $region3: #{my_block_forward.1} parent=0 // pred_check_branch
    %13 = sbr.rel (0) target = $region5
  $region4: #{my_block_forward.1} parent=0 // pred_region
    _
  $region5: #{my_block_forward.1} parent=0 // pred_fallthru
    _
  // Predicated region
  $region6: #{my_block_forward.1} parent=0 // pred_check
    _
  $region7: #{my_block_forward.1} parent=0 // pred_check_branch
    %15 = sbr.rel (0) target = $region9
  $region8: #{my_block_forward.1} parent=0 // pred_region
    _
  $region9: #{my_block_forward.1} parent=0 // pred_fallthru
    _
  // Predicated region
  $region10: #{my_block_forward.1} parent=0 // pred_check
    _
  $region11: #{my_block_forward.1} parent=0 // pred_check_branch
    %17 = sbr.rel (0) target = $region13
  $region12: #{my_block_forward.1} parent=0 // pred_region
    _
  $region13: #{my_block_forward.1} parent=0 // pred_fallthru
    _
  // Predicated region
  $region14: #{my_block_forward.1} parent=0 // pred_check
    _
  $region15: #{my_block_forward.1} parent=0 // pred_check_branch
    %19 = sbr.rel (0) target = $region17
  $region16: #{my_block_forward.1} parent=0 // pred_region
    _
  $region17: #{my_block_forward.1} parent=0 // pred_fallthru
    _
  // Predicated region
  $region18: #{my_block_forward.1} parent=0 // pred_check
    _
  $region19: #{my_block_forward.1} parent=0 // pred_check_branch
    %21 = sbr.rel (0) target = $region21
  $region20: #{my_block_forward.1} parent=0 // pred_region
    _
  $region21: #{my_block_forward.1} parent=0 // pred_fallthru
    _
  // Predicated region
  $region22: #{my_block_forward.1} parent=0 // pred_check
    _
  $region23: #{my_block_forward.1} parent=0 // pred_check_branch
    %23 = sbr.rel (0) target = $region25
  $region24: #{my_block_forward.1} parent=0 // pred_region
    _
  $region25: #{my_block_forward.1} parent=0 // pred_fallthru
    _
  // Predicated region
  $region26: #{my_block_forward.1} parent=0 // pred_check
    _
  $region27: #{my_block_forward.1} parent=0 // pred_check_branch
    %25 = sbr.rel (0) target = $region29
  $region28: #{my_block_forward.1} parent=0 // pred_region
    _
  $region29: #{my_block_forward.1} parent=0 // pred_fallthru
    _
  %v26 = vlaneseq
  %v27 = vand.u32 %v26, 127
  %v28 = vadd.s32 %v27, 128
  %v29 = vadd.s32 %v27, 256
  %v30 = vcvt.s32.f32 %v27
  %v31 = vcvt.s32.f32 %v28
  %v32 = vcvt.s32.f32 %v29
  %v33 = vrcp.pop 20.0
  %v34 = vmul.f32 %v30, %v33
  %v35 = vmul.f32 %v31, %v33
  %v36 = vmul.f32 %v32, %v33
  %v37 = vfloor.f32 %v34
  %v38 = vfloor.f32 %v35
  %v39 = vfloor.f32 %v36
  %v40 = vmul.f32 %v37, 20.0
  %v41 = vmul.f32 %v38, 20.0
  %v42 = vmul.f32 %v39, 20.0
  %v43 = vsub.f32 %v30, %v40
  %v44 = vsub.f32 %v31, %v41
  %v45 = vsub.f32 %v32, %v42
  %vm46 = vcmp.ge.f32.partialorder %v37, 1.0
  %vm47 = vcmp.ge.f32.partialorder %v38, 1.0
  %vm48 = vcmp.ge.f32.partialorder %v39, 1.0
  %vm49 = vcmp.lt.f32.partialorder %v37, 17.0
  %vm50 = vcmp.lt.f32.partialorder %v38, 17.0
  %vm51 = vcmp.lt.f32.partialorder %v39, 17.0
  %vm52 = vmand %vm46, %vm49
  %vm53 = vmand %vm47, %vm50
  %vm54 = vmand %vm48, %vm51
  %vm55 = vcmp.ge.f32.partialorder %v43, 1.0
  %vm56 = vcmp.ge.f32.partialorder %v44, 1.0
  %vm57 = vcmp.ge.f32.partialorder %v45, 1.0
  %vm58 = vmand %vm52, %vm55
  %vm59 = vmand %vm53, %vm56
  %vm60 = vmand %vm54, %vm57
  %vm61 = vcmp.lt.f32.partialorder %v43, 17.0
  %vm62 = vcmp.lt.f32.partialorder %v44, 17.0
  %vm63 = vcmp.lt.f32.partialorder %v45, 17.0
  %vm64 = vmand %vm58, %vm61
  %vm65 = vmand %vm59, %vm62
  %vm66 = vmand %vm60, %vm63
  %v67 = vsel %vm64, 1.0, 0.0
  %v68 = vsel %vm65, 1.0, 0.0
  %v69 = vsel %vm66, 1.0, 0.0
  %v70 = vadd.s32 %v27, 384
  %v71 = vcvt.s32.f32 %v70
  %v72 = vmul.f32 %v71, %v33
  %v73 = vfloor.f32 %v72
  %v74 = vmul.f32 %v73, 20.0
  %v75 = vsub.f32 %v71, %v74
  %vm76 = vcmp.ge.f32.partialorder %v37, 2.0
  %vm77 = vcmp.ge.f32.partialorder %v38, 2.0
  %vm78 = vcmp.ge.f32.partialorder %v39, 2.0
  %vm79 = vcmp.ge.f32.partialorder %v73, 2.0
  %vm80 = vcmp.lt.f32.partialorder %v37, 18.0
  %vm81 = vcmp.lt.f32.partialorder %v38, 18.0
  %vm82 = vcmp.lt.f32.partialorder %v39, 18.0
  %vm83 = vcmp.lt.f32.partialorder %v73, 18.0
  %vm84 = vmand %vm76, %vm80
  %vm85 = vmand %vm77, %vm81
  %vm86 = vmand %vm78, %vm82
  %vm87 = vmand %vm79, %vm83
  %vm88 = vcmp.ge.f32.partialorder %v43, 2.0
  %vm89 = vcmp.ge.f32.partialorder %v44, 2.0
  %vm90 = vcmp.ge.f32.partialorder %v45, 2.0
  %vm91 = vcmp.ge.f32.partialorder %v75, 2.0
  %vm92 = vmand %vm84, %vm88
  %vm93 = vmand %vm85, %vm89
  %vm94 = vmand %vm86, %vm90
  %vm95 = vmand %vm87, %vm91
  %vm96 = vcmp.lt.f32.partialorder %v43, 18.0
  %vm97 = vcmp.lt.f32.partialorder %v44, 18.0
  %vm98 = vcmp.lt.f32.partialorder %v45, 18.0
  %vm99 = vcmp.lt.f32.partialorder %v75, 18.0
  %vm100 = vmand %vm92, %vm96
  %vm101 = vmand %vm93, %vm97
  %vm102 = vmand %vm94, %vm98
  %vm103 = vmand %vm95, %vm99
  %v104 = vsel %vm100, 1.0, 0.0
  %v105 = vsel %vm101, 1.0, 0.0
  %v106 = vsel %vm102, 1.0, 0.0
  %v107 = vsel %vm103, 1.0, 0.0
  %v108 = vld [vmem:[%s0] sm:$0xff]
  %v109 = vld [vmem:[%s0 + $0x8] sm:$0xff]
  %v112 = vcombine.high %v108, %v108
  %v113 = vcombine.high %v109, %v109
  %vm116 = vcmask 1043456
  %v117 = vsel %vm116, %v108, 0.0
  %v118 = vsel %vm116, %v112, 0.0
  %v119 = vadd.f32 %v117, %v118
  %v120 = vsel %vm116, %v109, 0.0
  %v121 = vadd.f32 %v119, %v120
  %v122 = vsel %vm116, %v113, 0.0
  %v123 = vadd.f32 %v121, %v122
  %124 = vadd.xlane.f32.xlu0 %v123
  %v125 = vpop.xlane.xlu0 %124
  %v126 = vrot.slane %v125, 4
  %v127 = vadd.f32 %v125, %v126
  %v128 = vrot.slane %v127, 2
  %v129 = vadd.f32 %v127, %v128
  %v130 = vrot.slane %v129, 1
  %v131 = vadd.f32 %v129, %v130
  %s132 = vtos %v131
  %v133 = vrcp.pop 1024.0
  %s134 = vtos %v133
  %s135 = smul.f32 %s132, %s134
  %v136 = vstv %s135
  %v137 = vsub.f32 %v108, %v136
  %v138 = vsub.f32 %v109, %v136
  %v143 = vcombine.low %v104, %v105
  %v144 = vcombine.low %v106, %v107
  %v147 = vmul.f32 %v137, %v143
  %v148 = vmul.f32 %v138, %v144
  %v149 = vmul.f32 %v147, %v147
  %v150 = vmul.f32 %v148, %v148
  %v153 = vcombine.high %v149, %v149
  %v154 = vcombine.high %v150, %v150
  %v157 = vsel %vm116, %v149, 0.0
  %v158 = vsel %vm116, %v153, 0.0
  %v159 = vadd.f32 %v157, %v158
  %v160 = vsel %vm116, %v150, 0.0
  %v161 = vadd.f32 %v159, %v160
  %v162 = vsel %vm116, %v154, 0.0
  %v163 = vadd.f32 %v161, %v162
  %164 = vadd.xlane.f32.xlu0 %v163
  %v165 = vpop.xlane.xlu0 %164
  %v166 = vrot.slane %v165, 4
  %v167 = vadd.f32 %v165, %v166
  %v168 = vrot.slane %v167, 2
  %v169 = vadd.f32 %v167, %v168
  %v170 = vrot.slane %v169, 1
  %v171 = vadd.f32 %v169, %v170
  %s172 = vtos %v171
  %v173 = vrcp.pop 1024.0
  %s174 = vtos %v173
  %s175 = smul.f32 %s172, %s174
  %s176 = sadd.f32 %s175, 1e-05
  %v177 = vstv %s176
  %v178 = vrsqrt.pop %v177
  %s179 = vtos %v178
  %v180 = vstv %s179
  %v181 = vmul.f32 %v147, %v180
  %v182 = vmul.f32 %v148, %v180
  %v183 = vld [vmem:[%s1] sm:$0xff]
  %v184 = vld [vmem:[%s1 + $0x8] sm:$0xff]
  %v185 = vmul.f32 %v181, %v183
  %v186 = vmul.f32 %v182, %v184
  %v187 = vld [vmem:[%s2] sm:$0xff]
  %v188 = vld [vmem:[%s2 + $0x8] sm:$0xff]
  %v189 = vadd.f32 %v185, %v187
  %v190 = vadd.f32 %v186, %v188
  %v193 = vcombine.high %v189, %v189
  %v195 = vcombine.low %v189, %v189
  %v196 = vcombine.low %v190, %v190
  %197 = vrot.lane.b32.xlu0 %v195, 127
  %v198 = vpop.permute.xlu0 %197
  %199 = vrot.lane.b32.xlu0 %v189, 127
  %v200 = vpop.permute.xlu0 %199
  %201 = vrot.lane.b32.xlu0 %v196, 127
  %v202 = vpop.permute.xlu0 %201
  %203 = vrot.lane.b32.xlu0 %v190, 127
  %v204 = vpop.permute.xlu0 %203
  %vm205 = vcmask 1039360
  %v206 = vsel %vm205, %v198, %v200
  %v207 = vsel %vm205, %v200, %v202
  %v208 = vsel %vm205, %v202, %v204
  %v212 = vcombine.high %v190, %v190
  %213 = vrot.lane.b32.xlu0 %v189, 126
  %v214 = vpop.permute.xlu0 %213
  %215 = vrot.lane.b32.xlu0 %v193, 126
  %v216 = vpop.permute.xlu0 %215
  %217 = vrot.lane.b32.xlu0 %v190, 126
  %v218 = vpop.permute.xlu0 %217
  %219 = vrot.lane.b32.xlu0 %v212, 126
  %v220 = vpop.permute.xlu0 %219
  %vm221 = vcmask 1031168
  %v222 = vsel %vm221, %v214, %v216
  %v223 = vsel %vm221, %v216, %v218
  %v224 = vsel %vm221, %v218, %v220
  %228 = vrot.lane.b32.xlu0 %v195, 108
  %v229 = vpop.permute.xlu0 %228
  %230 = vrot.lane.b32.xlu0 %v189, 108
  %v231 = vpop.permute.xlu0 %230
  %232 = vrot.lane.b32.xlu0 %v196, 108
  %v233 = vpop.permute.xlu0 %232
  %234 = vrot.lane.b32.xlu0 %v190, 108
  %v235 = vpop.permute.xlu0 %234
  %vm236 = vcmask 883712
  %v237 = vsel %vm236, %v229, %v231
  %v238 = vsel %vm236, %v231, %v233
  %v239 = vsel %vm236, %v233, %v235
  %243 = vrot.lane.b32.xlu0 %v189, 107
  %v244 = vpop.permute.xlu0 %243
  %245 = vrot.lane.b32.xlu0 %v193, 107
  %v246 = vpop.permute.xlu0 %245
  %247 = vrot.lane.b32.xlu0 %v190, 107
  %v248 = vpop.permute.xlu0 %247
  %249 = vrot.lane.b32.xlu0 %v212, 107
  %v250 = vpop.permute.xlu0 %249
  %vm251 = vcmask 875520
  %v252 = vsel %vm251, %v244, %v246
  %v253 = vsel %vm251, %v246, %v248
  %v254 = vsel %vm251, %v248, %v250
  %258 = vrot.lane.b32.xlu0 %v195, 106
  %v259 = vpop.permute.xlu0 %258
  %260 = vrot.lane.b32.xlu0 %v189, 106
  %v261 = vpop.permute.xlu0 %260
  %262 = vrot.lane.b32.xlu0 %v196, 106
  %v263 = vpop.permute.xlu0 %262
  %264 = vrot.lane.b32.xlu0 %v190, 106
  %v265 = vpop.permute.xlu0 %264
  %vm266 = vcmask 867328
  %v267 = vsel %vm266, %v259, %v261
  %v268 = vsel %vm266, %v261, %v263
  %v269 = vsel %vm266, %v263, %v265
  %273 = vrot.lane.b32.xlu0 %v189, 88
  %v274 = vpop.permute.xlu0 %273
  %275 = vrot.lane.b32.xlu0 %v193, 88
  %v276 = vpop.permute.xlu0 %275
  %277 = vrot.lane.b32.xlu0 %v190, 88
  %v278 = vpop.permute.xlu0 %277
  %279 = vrot.lane.b32.xlu0 %v212, 88
  %v280 = vpop.permute.xlu0 %279
  %vm281 = vcmask 719872
  %v282 = vsel %vm281, %v274, %v276
  %v283 = vsel %vm281, %v276, %v278
  %v284 = vsel %vm281, %v278, %v280
  %288 = vrot.lane.b32.xlu0 %v195, 87
  %v289 = vpop.permute.xlu0 %288
  %290 = vrot.lane.b32.xlu0 %v189, 87
  %v291 = vpop.permute.xlu0 %290
  %292 = vrot.lane.b32.xlu0 %v196, 87
  %v293 = vpop.permute.xlu0 %292
  %294 = vrot.lane.b32.xlu0 %v190, 87
  %v295 = vpop.permute.xlu0 %294
  %vm296 = vcmask 711680
  %v297 = vsel %vm296, %v289, %v291
  %v298 = vsel %vm296, %v291, %v293
  %v299 = vsel %vm296, %v293, %v295
  %303 = vrot.lane.b32.xlu0 %v189, 86
  %v304 = vpop.permute.xlu0 %303
  %305 = vrot.lane.b32.xlu0 %v193, 86
  %v306 = vpop.permute.xlu0 %305
  %307 = vrot.lane.b32.xlu0 %v190, 86
  %v308 = vpop.permute.xlu0 %307
  %309 = vrot.lane.b32.xlu0 %v212, 86
  %v310 = vpop.permute.xlu0 %309
  %vm311 = vcmask 703488
  %v312 = vsel %vm311, %v304, %v306
  %v313 = vsel %vm311, %v306, %v308
  %v314 = vsel %vm311, %v308, %v310
  %v315 = vsel %vm116, %v189, %v206
  %v316 = vsel %vm116, %v193, %v207
  %v317 = vsel %vm116, %v190, %v208
  %v318 = vsel %vm116, %v222, %v237
  %v319 = vsel %vm116, %v223, %v238
  %v320 = vsel %vm116, %v224, %v239
  %v321 = vsel %vm116, %v252, %v267
  %v322 = vsel %vm116, %v253, %v268
  %v323 = vsel %vm116, %v254, %v269
  %v324 = vsel %vm116, %v282, %v297
  %v325 = vsel %vm116, %v283, %v298
  %v326 = vsel %vm116, %v284, %v299
  %v327 = vld [vmem:[%s3] sm:$0xff]
  %v328 = vld [vmem:[%s4] sm:$0xff]
  %330 = vset.pattern.permute.xlu0 0
  %331 = vperm.xlu0 %330, %v328
  %v332 = vpop.permute.xlu0 %331
  %vm334 = vcmask 293888
  %v336 = vsel %vm334, %v327, 0
  %v338 = vsel %vm116, %v312, 0
  %v340 = vsel %vm116, %v313, 0
  %v342 = vsel %vm116, %v314, 0
  %344 = vmatprep.subr.mxu0 0.0
  %345 = vmatpush1.msra.mxu0 0.0
  %346 = vmatprep.subr.mxu0 0.0
  %347 = vmatpush1.msra.mxu0 0.0
  %348 = vmatprep.subr.mxu0 0.0
  %349 = vmatpush1.msra.mxu0 0.0
  %350 = vmatprep.subr.mxu0 0.0
  %351 = vmatpush1.msra.mxu0 0.0
  %352 = vmatprep.subr.mxu0 0.0
  %353 = vmatpush1.msra.mxu0 0.0
  %354 = vmatprep.subr.mxu0 0.0
  %355 = vmatpush1.msra.mxu0 0.0
  %356 = vmatprep.subr.mxu0 0.0
  %357 = vmatpush1.msra.mxu0 0.0
  %358 = vmatprep.subr.mxu0 0.0
  %359 = vmatpush1.msra.mxu0 0.0
  %360 = vmatprep.subr.mxu0 0.0
  %361 = vmatpush1.msra.mxu0 0.0
  %362 = vmatprep.subr.mxu0 0.0
  %363 = vmatpush1.msra.mxu0 0.0
  %364 = vmatprep.subr.mxu0 0.0
  %365 = vmatpush1.msra.mxu0 0.0
  %366 = vmatprep.subr.mxu0 %v340
  %367 = vmatpush1.msra.mxu0 %v338
  %368 = vmatprep.subr.mxu0 %v325
  %369 = vmatpush1.msra.mxu0 %v324
  %370 = vmatprep.subr.mxu0 %v322
  %371 = vmatpush1.msra.mxu0 %v321
  %372 = vmatprep.subr.mxu0 %v319
  %373 = vmatpush1.msra.mxu0 %v318
  %374 = vmatprep.subr.mxu0 %v316
  %375 = vmatpush1.msra.mxu0 %v315
  %376 = vmatprep.subr.mxu0 0.0
  %377 = vmatpush2.msra.mxu0 0.0
  %378 = vmatprep.subr.mxu0 0.0
  %379 = vmatpush2.msra.mxu0 0.0
  %380 = vmatprep.subr.mxu0 0.0
  %381 = vmatpush2.msra.mxu0 0.0
  %382 = vmatprep.subr.mxu0 0.0
  %383 = vmatpush2.msra.mxu0 0.0
  %384 = vmatprep.subr.mxu0 0.0
  %385 = vmatpush2.msra.mxu0 0.0
  %386 = vmatprep.subr.mxu0 0.0
  %387 = vmatpush2.msra.mxu0 0.0
  %388 = vmatprep.subr.mxu0 0.0
  %389 = vmatpush2.msra.mxu0 0.0
  %390 = vmatprep.subr.mxu0 0.0
  %391 = vmatpush2.msra.mxu0 0.0
  %392 = vmatprep.subr.mxu0 0.0
  %393 = vmatpush2.msra.mxu0 0.0
  %394 = vmatprep.subr.mxu0 0.0
  %395 = vmatpush2.msra.mxu0 0.0
  %396 = vmatprep.subr.mxu0 0.0
  %397 = vmatpush2.msra.mxu0 0.0
  %398 = vmatprep.subr.mxu0 0.0
  %399 = vmatpush2.msra.mxu0 0.0
  %400 = vmatprep.subr.mxu0 0.0
  %401 = vmatpush2.msra.mxu0 0.0
  %402 = vmatprep.subr.mxu0 0.0
  %403 = vmatpush2.msra.mxu0 0.0
  %404 = vmatprep.subr.mxu0 0.0
  %405 = vmatpush2.msra.mxu0 0.0
  %406 = vmatprep.subr.mxu0 0.0
  %407 = vmatpush2.msra.mxu0 0.0
  %408 = vmatprep.mubr.f32.mxu0 0.0
  %409 = vmatmul.mubr.f32.gmra.mxu0 %v336
  %v410 = vpop.f32.mrf.mxu0
  %v411 = vadd.f32 %v332, %v410
  %v412 = vpop.f32.mrf.mxu0
  %v413 = vadd.f32 %v332, %v412
  %414 = vdwg.mxu0
  %415 = vmatprep.subr.mxu0 0.0
  %416 = vmatpush1.msra.mxu0 0.0
  %417 = vmatprep.subr.mxu0 0.0
  %418 = vmatpush1.msra.mxu0 0.0
  %419 = vmatprep.subr.mxu0 0.0
  %420 = vmatpush1.msra.mxu0 0.0
  %421 = vmatprep.subr.mxu0 0.0
  %422 = vmatpush1.msra.mxu0 0.0
  %423 = vmatprep.subr.mxu0 0.0
  %424 = vmatpush1.msra.mxu0 0.0
  %425 = vmatprep.subr.mxu0 0.0
  %426 = vmatpush1.msra.mxu0 0.0
  %427 = vmatprep.subr.mxu0 0.0
  %428 = vmatpush1.msra.mxu0 0.0
  %429 = vmatprep.subr.mxu0 0.0
  %430 = vmatpush1.msra.mxu0 0.0
  %431 = vmatprep.subr.mxu0 0.0
  %432 = vmatpush1.msra.mxu0 0.0
  %433 = vmatprep.subr.mxu0 0.0
  %434 = vmatpush1.msra.mxu0 0.0
  %435 = vmatprep.subr.mxu0 0.0
  %436 = vmatpush1.msra.mxu0 0.0
  %437 = vmatprep.subr.mxu0 0.0
  %438 = vmatpush1.msra.mxu0 %v342
  %439 = vmatprep.subr.mxu0 0.0
  %440 = vmatpush1.msra.mxu0 %v326
  %441 = vmatprep.subr.mxu0 0.0
  %442 = vmatpush1.msra.mxu0 %v323
  %443 = vmatprep.subr.mxu0 0.0
  %444 = vmatpush1.msra.mxu0 %v320
  %445 = vmatprep.subr.mxu0 0.0
  %446 = vmatpush1.msra.mxu0 %v317
  %447 = vmatprep.subr.mxu0 0.0
  %448 = vmatpush2.msra.mxu0 0.0
  %449 = vmatprep.subr.mxu0 0.0
  %450 = vmatpush2.msra.mxu0 0.0
  %451 = vmatprep.subr.mxu0 0.0
  %452 = vmatpush2.msra.mxu0 0.0
  %453 = vmatprep.subr.mxu0 0.0
  %454 = vmatpush2.msra.mxu0 0.0
  %455 = vmatprep.subr.mxu0 0.0
  %456 = vmatpush2.msra.mxu0 0.0
  %457 = vmatprep.subr.mxu0 0.0
  %458 = vmatpush2.msra.mxu0 0.0
  %459 = vmatprep.subr.mxu0 0.0
  %460 = vmatpush2.msra.mxu0 0.0
  %461 = vmatprep.subr.mxu0 0.0
  %462 = vmatpush2.msra.mxu0 0.0
  %463 = vmatprep.subr.mxu0 0.0
  %464 = vmatpush2.msra.mxu0 0.0
  %465 = vmatprep.subr.mxu0 0.0
  %466 = vmatpush2.msra.mxu0 0.0
  %467 = vmatprep.subr.mxu0 0.0
  %468 = vmatpush2.msra.mxu0 0.0
  %469 = vmatprep.subr.mxu0 0.0
  %470 = vmatpush2.msra.mxu0 0.0
  %471 = vmatprep.subr.mxu0 0.0
  %472 = vmatpush2.msra.mxu0 0.0
  %473 = vmatprep.subr.mxu0 0.0
  %474 = vmatpush2.msra.mxu0 0.0
  %475 = vmatprep.subr.mxu0 0.0
  %476 = vmatpush2.msra.mxu0 0.0
  %477 = vmatprep.subr.mxu0 0.0
  %478 = vmatpush2.msra.mxu0 0.0
  %479 = vmatprep.mubr.f32.mxu0 0.0
  %480 = vmatmul.mubr.f32.gmra.mxu0 %v336
  %v481 = vpop.f32.mrf.mxu0
  %v482 = vadd.f32 %v332, %v481
  %v483 = vpop.f32.mrf.mxu0
  %484 = vdwg.mxu0
  %v485 = vxor.u32 %v411, 2147483648
  %v486 = vxor.u32 %v413, 2147483648
  %v487 = vxor.u32 %v482, 2147483648
  %v488 = vmul.f32 %v485, 1.442695
  %v489 = vpow.pop %v488
  %v490 = vmul.f32 %v486, 1.442695
  %v491 = vpow.pop %v490
  %v492 = vmul.f32 %v487, 1.442695
  %v493 = vpow.pop %v492
  %v494 = vadd.f32 %v489, 1.0
  %v495 = vadd.f32 %v491, 1.0
  %v496 = vadd.f32 %v493, 1.0
  %v497 = vrcp.pop %v494
  %v498 = vmul.f32 1.0, %v497
  %v499 = vrcp.pop %v495
  %v500 = vmul.f32 1.0, %v499
  %v501 = vrcp.pop %v496
  %v502 = vmul.f32 1.0, %v501
  %v503 = vmul.f32 %v411, %v498
  %v504 = vmul.f32 %v413, %v500
  %v505 = vmul.f32 %v482, %v502
  %v506 = vmul.f32 %v503, %v67
  %v507 = vmul.f32 %v504, %v68
  %v508 = vmul.f32 %v505, %v69
  %512 = vrot.lane.b32.xlu0 %v506, 127
  %v513 = vpop.permute.xlu0 %512
  %514 = vrot.lane.b32.xlu0 %v507, 127
  %v515 = vpop.permute.xlu0 %514
  %516 = vrot.lane.b32.xlu0 %v508, 127
  %v517 = vpop.permute.xlu0 %516
  %v518 = vsel %vm205, %v513, %v515
  %v519 = vsel %vm205, %v515, %v517
  %523 = vrot.lane.b32.xlu0 %v506, 126
  %v524 = vpop.permute.xlu0 %523
  %525 = vrot.lane.b32.xlu0 %v507, 126
  %v526 = vpop.permute.xlu0 %525
  %527 = vrot.lane.b32.xlu0 %v508, 126
  %v528 = vpop.permute.xlu0 %527
  %v529 = vsel %vm221, %v524, %v526
  %v530 = vsel %vm221, %v526, %v528
  %534 = vrot.lane.b32.xlu0 %v506, 108
  %v535 = vpop.permute.xlu0 %534
  %536 = vrot.lane.b32.xlu0 %v507, 108
  %v537 = vpop.permute.xlu0 %536
  %538 = vrot.lane.b32.xlu0 %v508, 108
  %v539 = vpop.permute.xlu0 %538
  %v540 = vsel %vm236, %v535, %v537
  %v541 = vsel %vm236, %v537, %v539
  %545 = vrot.lane.b32.xlu0 %v506, 107
  %v546 = vpop.permute.xlu0 %545
  %547 = vrot.lane.b32.xlu0 %v507, 107
  %v548 = vpop.permute.xlu0 %547
  %549 = vrot.lane.b32.xlu0 %v508, 107
  %v550 = vpop.permute.xlu0 %549
  %v551 = vsel %vm251, %v546, %v548
  %v552 = vsel %vm251, %v548, %v550
  %556 = vrot.lane.b32.xlu0 %v506, 106
  %v557 = vpop.permute.xlu0 %556
  %558 = vrot.lane.b32.xlu0 %v507, 106
  %v559 = vpop.permute.xlu0 %558
  %560 = vrot.lane.b32.xlu0 %v508, 106
  %v561 = vpop.permute.xlu0 %560
  %v562 = vsel %vm266, %v557, %v559
  %v563 = vsel %vm266, %v559, %v561
  %567 = vrot.lane.b32.xlu0 %v506, 88
  %v568 = vpop.permute.xlu0 %567
  %569 = vrot.lane.b32.xlu0 %v507, 88
  %v570 = vpop.permute.xlu0 %569
  %571 = vrot.lane.b32.xlu0 %v508, 88
  %v572 = vpop.permute.xlu0 %571
  %v573 = vsel %vm281, %v568, %v570
  %v574 = vsel %vm281, %v570, %v572
  %578 = vrot.lane.b32.xlu0 %v506, 87
  %v579 = vpop.permute.xlu0 %578
  %580 = vrot.lane.b32.xlu0 %v507, 87
  %v581 = vpop.permute.xlu0 %580
  %582 = vrot.lane.b32.xlu0 %v508, 87
  %v583 = vpop.permute.xlu0 %582
  %v584 = vsel %vm296, %v579, %v581
  %v585 = vsel %vm296, %v581, %v583
  %589 = vrot.lane.b32.xlu0 %v506, 86
  %v590 = vpop.permute.xlu0 %589
  %591 = vrot.lane.b32.xlu0 %v507, 86
  %v592 = vpop.permute.xlu0 %591
  %593 = vrot.lane.b32.xlu0 %v508, 86
  %v594 = vpop.permute.xlu0 %593
  %v595 = vsel %vm311, %v590, %v592
  %v596 = vsel %vm311, %v592, %v594
  %v600 = vld [vmem:[%s5] sm:$0xff]
  %v601 = vld [vmem:[%s6] sm:$0xff]
  %603 = vset.pattern.permute.xlu0 0
  %604 = vperm.xlu0 %603, %v601
  %v605 = vpop.permute.xlu0 %604
  %vm607 = vcmask 588800
  %v609 = vsel %vm607, %v600, 0
  %611 = vmatprep.subr.mxu0 0.0
  %612 = vmatpush1.msra.mxu0 0.0
  %613 = vmatprep.subr.mxu0 0.0
  %614 = vmatpush1.msra.mxu0 0.0
  %615 = vmatprep.subr.mxu0 0.0
  %616 = vmatpush1.msra.mxu0 0.0
  %617 = vmatprep.subr.mxu0 0.0
  %618 = vmatpush1.msra.mxu0 0.0
  %619 = vmatprep.subr.mxu0 0.0
  %620 = vmatpush1.msra.mxu0 0.0
  %621 = vmatprep.subr.mxu0 0.0
  %622 = vmatpush1.msra.mxu0 0.0
  %623 = vmatprep.subr.mxu0 0.0
  %624 = vmatpush1.msra.mxu0 0.0
  %625 = vmatprep.subr.mxu0 %v596
  %626 = vmatpush1.msra.mxu0 %v595
  %627 = vmatprep.subr.mxu0 %v585
  %628 = vmatpush1.msra.mxu0 %v584
  %629 = vmatprep.subr.mxu0 %v574
  %630 = vmatpush1.msra.mxu0 %v573
  %631 = vmatprep.subr.mxu0 %v563
  %632 = vmatpush1.msra.mxu0 %v562
  %633 = vmatprep.subr.mxu0 %v552
  %634 = vmatpush1.msra.mxu0 %v551
  %635 = vmatprep.subr.mxu0 %v541
  %636 = vmatpush1.msra.mxu0 %v540
  %637 = vmatprep.subr.mxu0 %v530
  %638 = vmatpush1.msra.mxu0 %v529
  %639 = vmatprep.subr.mxu0 %v519
  %640 = vmatpush1.msra.mxu0 %v518
  %641 = vmatprep.subr.mxu0 %v507
  %642 = vmatpush1.msra.mxu0 %v506
  %643 = vmatprep.subr.mxu0 0.0
  %644 = vmatpush2.msra.mxu0 0.0
  %645 = vmatprep.subr.mxu0 0.0
  %646 = vmatpush2.msra.mxu0 0.0
  %647 = vmatprep.subr.mxu0 0.0
  %648 = vmatpush2.msra.mxu0 0.0
  %649 = vmatprep.subr.mxu0 0.0
  %650 = vmatpush2.msra.mxu0 0.0
  %651 = vmatprep.subr.mxu0 0.0
  %652 = vmatpush2.msra.mxu0 0.0
  %653 = vmatprep.subr.mxu0 0.0
  %654 = vmatpush2.msra.mxu0 0.0
  %655 = vmatprep.subr.mxu0 0.0
  %656 = vmatpush2.msra.mxu0 0.0
  %657 = vmatprep.subr.mxu0 0.0
  %658 = vmatpush2.msra.mxu0 0.0
  %659 = vmatprep.subr.mxu0 0.0
  %660 = vmatpush2.msra.mxu0 0.0
  %661 = vmatprep.subr.mxu0 0.0
  %662 = vmatpush2.msra.mxu0 0.0
  %663 = vmatprep.subr.mxu0 0.0
  %664 = vmatpush2.msra.mxu0 0.0
  %665 = vmatprep.subr.mxu0 0.0
  %666 = vmatpush2.msra.mxu0 0.0
  %667 = vmatprep.subr.mxu0 0.0
  %668 = vmatpush2.msra.mxu0 0.0
  %669 = vmatprep.subr.mxu0 0.0
  %670 = vmatpush2.msra.mxu0 0.0
  %671 = vmatprep.subr.mxu0 0.0
  %672 = vmatpush2.msra.mxu0 0.0
  %673 = vmatprep.subr.mxu0 0.0
  %674 = vmatpush2.msra.mxu0 0.0
  %675 = vmatprep.mubr.f32.mxu0 0.0
  %676 = vmatmul.mubr.f32.gmra.mxu0 %v609
  %v677 = vpop.f32.mrf.mxu0
  %v678 = vadd.f32 %v605, %v677
  %v679 = vpop.f32.mrf.mxu0
  %v680 = vadd.f32 %v605, %v679
  %681 = vdwg.mxu0
  %682 = vmatprep.subr.mxu0 0.0
  %683 = vmatpush1.msra.mxu0 0.0
  %684 = vmatprep.subr.mxu0 0.0
  %685 = vmatpush1.msra.mxu0 0.0
  %686 = vmatprep.subr.mxu0 0.0
  %687 = vmatpush1.msra.mxu0 0.0
  %688 = vmatprep.subr.mxu0 0.0
  %689 = vmatpush1.msra.mxu0 0.0
  %690 = vmatprep.subr.mxu0 0.0
  %691 = vmatpush1.msra.mxu0 0.0
  %692 = vmatprep.subr.mxu0 0.0
  %693 = vmatpush1.msra.mxu0 0.0
  %694 = vmatprep.subr.mxu0 0.0
  %695 = vmatpush1.msra.mxu0 0.0
  %696 = vmatprep.subr.mxu0 0.0
  %697 = vmatpush1.msra.mxu0 %v594
  %698 = vmatprep.subr.mxu0 0.0
  %699 = vmatpush1.msra.mxu0 %v583
  %700 = vmatprep.subr.mxu0 0.0
  %701 = vmatpush1.msra.mxu0 %v572
  %702 = vmatprep.subr.mxu0 0.0
  %703 = vmatpush1.msra.mxu0 %v561
  %704 = vmatprep.subr.mxu0 0.0
  %705 = vmatpush1.msra.mxu0 %v550
  %706 = vmatprep.subr.mxu0 0.0
  %707 = vmatpush1.msra.mxu0 %v539
  %708 = vmatprep.subr.mxu0 0.0
  %709 = vmatpush1.msra.mxu0 %v528
  %710 = vmatprep.subr.mxu0 0.0
  %711 = vmatpush1.msra.mxu0 %v517
  %712 = vmatprep.subr.mxu0 0.0
  %713 = vmatpush1.msra.mxu0 %v508
  %714 = vmatprep.subr.mxu0 0.0
  %715 = vmatpush2.msra.mxu0 0.0
  %716 = vmatprep.subr.mxu0 0.0
  %717 = vmatpush2.msra.mxu0 0.0
  %718 = vmatprep.subr.mxu0 0.0
  %719 = vmatpush2.msra.mxu0 0.0
  %720 = vmatprep.subr.mxu0 0.0
  %721 = vmatpush2.msra.mxu0 0.0
  %722 = vmatprep.subr.mxu0 0.0
  %723 = vmatpush2.msra.mxu0 0.0
  %724 = vmatprep.subr.mxu0 0.0
  %725 = vmatpush2.msra.mxu0 0.0
  %726 = vmatprep.subr.mxu0 0.0
  %727 = vmatpush2.msra.mxu0 0.0
  %728 = vmatprep.subr.mxu0 0.0
  %729 = vmatpush2.msra.mxu0 0.0
  %730 = vmatprep.subr.mxu0 0.0
  %731 = vmatpush2.msra.mxu0 0.0
  %732 = vmatprep.subr.mxu0 0.0
  %733 = vmatpush2.msra.mxu0 0.0
  %734 = vmatprep.subr.mxu0 0.0
  %735 = vmatpush2.msra.mxu0 0.0
  %736 = vmatprep.subr.mxu0 0.0
  %737 = vmatpush2.msra.mxu0 0.0
  %738 = vmatprep.subr.mxu0 0.0
  %739 = vmatpush2.msra.mxu0 0.0
  %740 = vmatprep.subr.mxu0 0.0
  %741 = vmatpush2.msra.mxu0 0.0
  %742 = vmatprep.subr.mxu0 0.0
  %743 = vmatpush2.msra.mxu0 0.0
  %744 = vmatprep.subr.mxu0 0.0
  %745 = vmatpush2.msra.mxu0 0.0
  %746 = vmatprep.mubr.f32.mxu0 0.0
  %747 = vmatmul.mubr.f32.gmra.mxu0 %v609
  %v748 = vpop.f32.mrf.mxu0
  %v749 = vadd.f32 %v605, %v748
  %v750 = vpop.f32.mrf.mxu0
  %751 = vdwg.mxu0
  %v752 = vxor.u32 %v678, 2147483648
  %v753 = vxor.u32 %v680, 2147483648
  %v754 = vxor.u32 %v749, 2147483648
  %v755 = vmul.f32 %v752, 1.442695
  %v756 = vpow.pop %v755
  %v757 = vmul.f32 %v753, 1.442695
  %v758 = vpow.pop %v757
  %v759 = vmul.f32 %v754, 1.442695
  %v760 = vpow.pop %v759
  %v761 = vadd.f32 %v756, 1.0
  %v762 = vadd.f32 %v758, 1.0
  %v763 = vadd.f32 %v760, 1.0
  %v764 = vrcp.pop %v761
  %v765 = vmul.f32 1.0, %v764
  %v766 = vrcp.pop %v762
  %v767 = vmul.f32 1.0, %v766
  %v768 = vrcp.pop %v763
  %v769 = vmul.f32 1.0, %v768
  %v770 = vmul.f32 %v678, %v765
  %v771 = vmul.f32 %v680, %v767
  %v772 = vmul.f32 %v749, %v769
  %773 = vst [vmem:[%s7] sm:$0xff] %v770
  %774 = vst [vmem:[%s7 + $0x8] sm:$0xff] %v771
  %vm775 = vcmask 523264
  %776 = vst.msk [vmem:[%s7 + $0x10] sm:$0xff] %vm775, %v772
  %s777 = scalar_lea.vmem %s0, 16
  %v778 = vld [vmem:[%s777] sm:$0xff]
  %v779 = vld [vmem:[%s777 + $0x8] sm:$0xff]
  %v782 = vcombine.high %v778, %v778
  %v783 = vcombine.high %v779, %v779
  %v786 = vsel %vm116, %v778, 0.0
  %v787 = vsel %vm116, %v782, 0.0
  %v788 = vadd.f32 %v786, %v787
  %v789 = vsel %vm116, %v779, 0.0
  %v790 = vadd.f32 %v788, %v789
  %v791 = vsel %vm116, %v783, 0.0
  %v792 = vadd.f32 %v790, %v791
  %793 = vadd.xlane.f32.xlu0 %v792
  %v794 = vpop.xlane.xlu0 %793
  %v795 = vrot.slane %v794, 4
  %v796 = vadd.f32 %v794, %v795
  %v797 = vrot.slane %v796, 2
  %v798 = vadd.f32 %v796, %v797
  %v799 = vrot.slane %v798, 1
  %v800 = vadd.f32 %v798, %v799
  %s801 = vtos %v800
  %v802 = vrcp.pop 1024.0
  %s803 = vtos %v802
  %s804 = smul.f32 %s801, %s803
  %v805 = vstv %s804
  %v806 = vsub.f32 %v778, %v805
  %v807 = vsub.f32 %v779, %v805
  %v808 = vmul.f32 %v806, %v143
  %v809 = vmul.f32 %v807, %v144
  %v810 = vmul.f32 %v808, %v808
  %v811 = vmul.f32 %v809, %v809
  %v814 = vcombine.high %v810, %v810
  %v815 = vcombine.high %v811, %v811
  %v818 = vsel %vm116, %v810, 0.0
  %v819 = vsel %vm116, %v814, 0.0
  %v820 = vadd.f32 %v818, %v819
  %v821 = vsel %vm116, %v811, 0.0
  %v822 = vadd.f32 %v820, %v821
  %v823 = vsel %vm116, %v815, 0.0
  %v824 = vadd.f32 %v822, %v823
  %825 = vadd.xlane.f32.xlu0 %v824
  %v826 = vpop.xlane.xlu0 %825
  %v827 = vrot.slane %v826, 4
  %v828 = vadd.f32 %v826, %v827
  %v829 = vrot.slane %v828, 2
  %v830 = vadd.f32 %v828, %v829
  %v831 = vrot.slane %v830, 1
  %v832 = vadd.f32 %v830, %v831
  %s833 = vtos %v832
  %v834 = vrcp.pop 1024.0
  %s835 = vtos %v834
  %s836 = smul.f32 %s833, %s835
  %s837 = sadd.f32 %s836, 1e-05
  %v838 = vstv %s837
  %v839 = vrsqrt.pop %v838
  %s840 = vtos %v839
  %v841 = vstv %s840
  %v842 = vmul.f32 %v808, %v841
  %v843 = vmul.f32 %v809, %v841
  %v844 = vld [vmem:[%s1] sm:$0xff]
  %v845 = vld [vmem:[%s1 + $0x8] sm:$0xff]
  %v846 = vmul.f32 %v842, %v844
  %v847 = vmul.f32 %v843, %v845
  %v848 = vld [vmem:[%s2] sm:$0xff]
  %v849 = vld [vmem:[%s2 + $0x8] sm:$0xff]
  %v850 = vadd.f32 %v846, %v848
  %v851 = vadd.f32 %v847, %v849
  %v854 = vcombine.high %v850, %v850
  %v856 = vcombine.low %v850, %v850
  %v857 = vcombine.low %v851, %v851
  %858 = vrot.lane.b32.xlu0 %v856, 127
  %v859 = vpop.permute.xlu0 %858
  %860 = vrot.lane.b32.xlu0 %v850, 127
  %v861 = vpop.permute.xlu0 %860
  %862 = vrot.lane.b32.xlu0 %v857, 127
  %v863 = vpop.permute.xlu0 %862
  %864 = vrot.lane.b32.xlu0 %v851, 127
  %v865 = vpop.permute.xlu0 %864
  %v866 = vsel %vm205, %v859, %v861
  %v867 = vsel %vm205, %v861, %v863
  %v868 = vsel %vm205, %v863, %v865
  %v872 = vcombine.high %v851, %v851
  %873 = vrot.lane.b32.xlu0 %v850, 126
  %v874 = vpop.permute.xlu0 %873
  %875 = vrot.lane.b32.xlu0 %v854, 126
  %v876 = vpop.permute.xlu0 %875
  %877 = vrot.lane.b32.xlu0 %v851, 126
  %v878 = vpop.permute.xlu0 %877
  %879 = vrot.lane.b32.xlu0 %v872, 126
  %v880 = vpop.permute.xlu0 %879
  %v881 = vsel %vm221, %v874, %v876
  %v882 = vsel %vm221, %v876, %v878
  %v883 = vsel %vm221, %v878, %v880
  %887 = vrot.lane.b32.xlu0 %v856, 108
  %v888 = vpop.permute.xlu0 %887
  %889 = vrot.lane.b32.xlu0 %v850, 108
  %v890 = vpop.permute.xlu0 %889
  %891 = vrot.lane.b32.xlu0 %v857, 108
  %v892 = vpop.permute.xlu0 %891
  %893 = vrot.lane.b32.xlu0 %v851, 108
  %v894 = vpop.permute.xlu0 %893
  %v895 = vsel %vm236, %v888, %v890
  %v896 = vsel %vm236, %v890, %v892
  %v897 = vsel %vm236, %v892, %v894
  %901 = vrot.lane.b32.xlu0 %v850, 107
  %v902 = vpop.permute.xlu0 %901
  %903 = vrot.lane.b32.xlu0 %v854, 107
  %v904 = vpop.permute.xlu0 %903
  %905 = vrot.lane.b32.xlu0 %v851, 107
  %v906 = vpop.permute.xlu0 %905
  %907 = vrot.lane.b32.xlu0 %v872, 107
  %v908 = vpop.permute.xlu0 %907
  %v909 = vsel %vm251, %v902, %v904
  %v910 = vsel %vm251, %v904, %v906
  %v911 = vsel %vm251, %v906, %v908
  %915 = vrot.lane.b32.xlu0 %v856, 106
  %v916 = vpop.permute.xlu0 %915
  %917 = vrot.lane.b32.xlu0 %v850, 106
  %v918 = vpop.permute.xlu0 %917
  %919 = vrot.lane.b32.xlu0 %v857, 106
  %v920 = vpop.permute.xlu0 %919
  %921 = vrot.lane.b32.xlu0 %v851, 106
  %v922 = vpop.permute.xlu0 %921
  %v923 = vsel %vm266, %v916, %v918
  %v924 = vsel %vm266, %v918, %v920
  %v925 = vsel %vm266, %v920, %v922
  %929 = vrot.lane.b32.xlu0 %v850, 88
  %v930 = vpop.permute.xlu0 %929
  %931 = vrot.lane.b32.xlu0 %v854, 88
  %v932 = vpop.permute.xlu0 %931
  %933 = vrot.lane.b32.xlu0 %v851, 88
  %v934 = vpop.permute.xlu0 %933
  %935 = vrot.lane.b32.xlu0 %v872, 88
  %v936 = vpop.permute.xlu0 %935
  %v937 = vsel %vm281, %v930, %v932
  %v938 = vsel %vm281, %v932, %v934
  %v939 = vsel %vm281, %v934, %v936
  %943 = vrot.lane.b32.xlu0 %v856, 87
  %v944 = vpop.permute.xlu0 %943
  %945 = vrot.lane.b32.xlu0 %v850, 87
  %v946 = vpop.permute.xlu0 %945
  %947 = vrot.lane.b32.xlu0 %v857, 87
  %v948 = vpop.permute.xlu0 %947
  %949 = vrot.lane.b32.xlu0 %v851, 87
  %v950 = vpop.permute.xlu0 %949
  %v951 = vsel %vm296, %v944, %v946
  %v952 = vsel %vm296, %v946, %v948
  %v953 = vsel %vm296, %v948, %v950
  %957 = vrot.lane.b32.xlu0 %v850, 86
  %v958 = vpop.permute.xlu0 %957
  %959 = vrot.lane.b32.xlu0 %v854, 86
  %v960 = vpop.permute.xlu0 %959
  %961 = vrot.lane.b32.xlu0 %v851, 86
  %v962 = vpop.permute.xlu0 %961
  %963 = vrot.lane.b32.xlu0 %v872, 86
  %v964 = vpop.permute.xlu0 %963
  %v965 = vsel %vm311, %v958, %v960
  %v966 = vsel %vm311, %v960, %v962
  %v967 = vsel %vm311, %v962, %v964
  %v968 = vsel %vm116, %v850, %v866
  %v969 = vsel %vm116, %v854, %v867
  %v970 = vsel %vm116, %v851, %v868
  %v971 = vsel %vm116, %v881, %v895
  %v972 = vsel %vm116, %v882, %v896
  %v973 = vsel %vm116, %v883, %v897
  %v974 = vsel %vm116, %v909, %v923
  %v975 = vsel %vm116, %v910, %v924
  %v976 = vsel %vm116, %v911, %v925
  %v977 = vsel %vm116, %v937, %v951
  %v978 = vsel %vm116, %v938, %v952
  %v979 = vsel %vm116, %v939, %v953
  %v980 = vld [vmem:[%s3] sm:$0xff]
  %v981 = vld [vmem:[%s4] sm:$0xff]
  %983 = vset.pattern.permute.xlu0 0
  %984 = vperm.xlu0 %983, %v981
  %v985 = vpop.permute.xlu0 %984
  %v988 = vsel %vm334, %v980, 0
  %v990 = vsel %vm116, %v965, 0
  %v992 = vsel %vm116, %v966, 0
  %v994 = vsel %vm116, %v967, 0
  %996 = vmatprep.subr.mxu0 0.0
  %997 = vmatpush1.msra.mxu0 0.0
  %998 = vmatprep.subr.mxu0 0.0
  %999 = vmatpush1.msra.mxu0 0.0
  %1000 = vmatprep.subr.mxu0 0.0
  %1001 = vmatpush1.msra.mxu0 0.0
  %1002 = vmatprep.subr.mxu0 0.0
  %1003 = vmatpush1.msra.mxu0 0.0
  %1004 = vmatprep.subr.mxu0 0.0
  %1005 = vmatpush1.msra.mxu0 0.0
  %1006 = vmatprep.subr.mxu0 0.0
  %1007 = vmatpush1.msra.mxu0 0.0
  %1008 = vmatprep.subr.mxu0 0.0
  %1009 = vmatpush1.msra.mxu0 0.0
  %1010 = vmatprep.subr.mxu0 0.0
  %1011 = vmatpush1.msra.mxu0 0.0
  %1012 = vmatprep.subr.mxu0 0.0
  %1013 = vmatpush1.msra.mxu0 0.0
  %1014 = vmatprep.subr.mxu0 0.0
  %1015 = vmatpush1.msra.mxu0 0.0
  %1016 = vmatprep.subr.mxu0 0.0
  %1017 = vmatpush1.msra.mxu0 0.0
  %1018 = vmatprep.subr.mxu0 %v992
  %1019 = vmatpush1.msra.mxu0 %v990
  %1020 = vmatprep.subr.mxu0 %v978
  %1021 = vmatpush1.msra.mxu0 %v977
  %1022 = vmatprep.subr.mxu0 %v975
  %1023 = vmatpush1.msra.mxu0 %v974
  %1024 = vmatprep.subr.mxu0 %v972
  %1025 = vmatpush1.msra.mxu0 %v971
  %1026 = vmatprep.subr.mxu0 %v969
  %1027 = vmatpush1.msra.mxu0 %v968
  %1028 = vmatprep.subr.mxu0 0.0
  %1029 = vmatpush2.msra.mxu0 0.0
  %1030 = vmatprep.subr.mxu0 0.0
  %1031 = vmatpush2.msra.mxu0 0.0
  %1032 = vmatprep.subr.mxu0 0.0
  %1033 = vmatpush2.msra.mxu0 0.0
  %1034 = vmatprep.subr.mxu0 0.0
  %1035 = vmatpush2.msra.mxu0 0.0
  %1036 = vmatprep.subr.mxu0 0.0
  %1037 = vmatpush2.msra.mxu0 0.0
  %1038 = vmatprep.subr.mxu0 0.0
  %1039 = vmatpush2.msra.mxu0 0.0
  %1040 = vmatprep.subr.mxu0 0.0
  %1041 = vmatpush2.msra.mxu0 0.0
  %1042 = vmatprep.subr.mxu0 0.0
  %1043 = vmatpush2.msra.mxu0 0.0
  %1044 = vmatprep.subr.mxu0 0.0
  %1045 = vmatpush2.msra.mxu0 0.0
  %1046 = vmatprep.subr.mxu0 0.0
  %1047 = vmatpush2.msra.mxu0 0.0
  %1048 = vmatprep.subr.mxu0 0.0
  %1049 = vmatpush2.msra.mxu0 0.0
  %1050 = vmatprep.subr.mxu0 0.0
  %1051 = vmatpush2.msra.mxu0 0.0
  %1052 = vmatprep.subr.mxu0 0.0
  %1053 = vmatpush2.msra.mxu0 0.0
  %1054 = vmatprep.subr.mxu0 0.0
  %1055 = vmatpush2.msra.mxu0 0.0
  %1056 = vmatprep.subr.mxu0 0.0
  %1057 = vmatpush2.msra.mxu0 0.0
  %1058 = vmatprep.subr.mxu0 0.0
  %1059 = vmatpush2.msra.mxu0 0.0
  %1060 = vmatprep.mubr.f32.mxu0 0.0
  %1061 = vmatmul.mubr.f32.gmra.mxu0 %v988
  %v1062 = vpop.f32.mrf.mxu0
  %v1063 = vadd.f32 %v985, %v1062
  %v1064 = vpop.f32.mrf.mxu0
  %v1065 = vadd.f32 %v985, %v1064
  %1066 = vdwg.mxu0
  %1067 = vmatprep.subr.mxu0 0.0
  %1068 = vmatpush1.msra.mxu0 0.0
  %1069 = vmatprep.subr.mxu0 0.0
  %1070 = vmatpush1.msra.mxu0 0.0
  %1071 = vmatprep.subr.mxu0 0.0
  %1072 = vmatpush1.msra.mxu0 0.0
  %1073 = vmatprep.subr.mxu0 0.0
  %1074 = vmatpush1.msra.mxu0 0.0
  %1075 = vmatprep.subr.mxu0 0.0
  %1076 = vmatpush1.msra.mxu0 0.0
  %1077 = vmatprep.subr.mxu0 0.0
  %1078 = vmatpush1.msra.mxu0 0.0
  %1079 = vmatprep.subr.mxu0 0.0
  %1080 = vmatpush1.msra.mxu0 0.0
  %1081 = vmatprep.subr.mxu0 0.0
  %1082 = vmatpush1.msra.mxu0 0.0
  %1083 = vmatprep.subr.mxu0 0.0
  %1084 = vmatpush1.msra.mxu0 0.0
  %1085 = vmatprep.subr.mxu0 0.0
  %1086 = vmatpush1.msra.mxu0 0.0
  %1087 = vmatprep.subr.mxu0 0.0
  %1088 = vmatpush1.msra.mxu0 0.0
  %1089 = vmatprep.subr.mxu0 0.0
  %1090 = vmatpush1.msra.mxu0 %v994
  %1091 = vmatprep.subr.mxu0 0.0
  %1092 = vmatpush1.msra.mxu0 %v979
  %1093 = vmatprep.subr.mxu0 0.0
  %1094 = vmatpush1.msra.mxu0 %v976
  %1095 = vmatprep.subr.mxu0 0.0
  %1096 = vmatpush1.msra.mxu0 %v973
  %1097 = vmatprep.subr.mxu0 0.0
  %1098 = vmatpush1.msra.mxu0 %v970
  %1099 = vmatprep.subr.mxu0 0.0
  %1100 = vmatpush2.msra.mxu0 0.0
  %1101 = vmatprep.subr.mxu0 0.0
  %1102 = vmatpush2.msra.mxu0 0.0
  %1103 = vmatprep.subr.mxu0 0.0
  %1104 = vmatpush2.msra.mxu0 0.0
  %1105 = vmatprep.subr.mxu0 0.0
  %1106 = vmatpush2.msra.mxu0 0.0
  %1107 = vmatprep.subr.mxu0 0.0
  %1108 = vmatpush2.msra.mxu0 0.0
  %1109 = vmatprep.subr.mxu0 0.0
  %1110 = vmatpush2.msra.mxu0 0.0
  %1111 = vmatprep.subr.mxu0 0.0
  %1112 = vmatpush2.msra.mxu0 0.0
  %1113 = vmatprep.subr.mxu0 0.0
  %1114 = vmatpush2.msra.mxu0 0.0
  %1115 = vmatprep.subr.mxu0 0.0
  %1116 = vmatpush2.msra.mxu0 0.0
  %1117 = vmatprep.subr.mxu0 0.0
  %1118 = vmatpush2.msra.mxu0 0.0
  %1119 = vmatprep.subr.mxu0 0.0
  %1120 = vmatpush2.msra.mxu0 0.0
  %1121 = vmatprep.subr.mxu0 0.0
  %1122 = vmatpush2.msra.mxu0 0.0
  %1123 = vmatprep.subr.mxu0 0.0
  %1124 = vmatpush2.msra.mxu0 0.0
  %1125 = vmatprep.subr.mxu0 0.0
  %1126 = vmatpush2.msra.mxu0 0.0
  %1127 = vmatprep.subr.mxu0 0.0
  %1128 = vmatpush2.msra.mxu0 0.0
  %1129 = vmatprep.subr.mxu0 0.0
  %1130 = vmatpush2.msra.mxu0 0.0
  %1131 = vmatprep.mubr.f32.mxu0 0.0
  %1132 = vmatmul.mubr.f32.gmra.mxu0 %v988
  %v1133 = vpop.f32.mrf.mxu0
  %v1134 = vadd.f32 %v985, %v1133
  %v1135 = vpop.f32.mrf.mxu0
  %1136 = vdwg.mxu0
  %v1137 = vxor.u32 %v1063, 2147483648
  %v1138 = vxor.u32 %v1065, 2147483648
  %v1139 = vxor.u32 %v1134, 2147483648
  %v1140 = vmul.f32 %v1137, 1.442695
  %v1141 = vpow.pop %v1140
  %v1142 = vmul.f32 %v1138, 1.442695
  %v1143 = vpow.pop %v1142
  %v1144 = vmul.f32 %v1139, 1.442695
  %v1145 = vpow.pop %v1144
  %v1146 = vadd.f32 %v1141, 1.0
  %v1147 = vadd.f32 %v1143, 1.0
  %v1148 = vadd.f32 %v1145, 1.0
  %v1149 = vrcp.pop %v1146
  %v1150 = vmul.f32 1.0, %v1149
  %v1151 = vrcp.pop %v1147
  %v1152 = vmul.f32 1.0, %v1151
  %v1153 = vrcp.pop %v1148
  %v1154 = vmul.f32 1.0, %v1153
  %v1155 = vmul.f32 %v1063, %v1150
  %v1156 = vmul.f32 %v1065, %v1152
  %v1157 = vmul.f32 %v1134, %v1154
  %v1158 = vmul.f32 %v1155, %v67
  %v1159 = vmul.f32 %v1156, %v68
  %v1160 = vmul.f32 %v1157, %v69
  %1164 = vrot.lane.b32.xlu0 %v1158, 127
  %v1165 = vpop.permute.xlu0 %1164
  %1166 = vrot.lane.b32.xlu0 %v1159, 127
  %v1167 = vpop.permute.xlu0 %1166
  %1168 = vrot.lane.b32.xlu0 %v1160, 127
  %v1169 = vpop.permute.xlu0 %1168
  %v1170 = vsel %vm205, %v1165, %v1167
  %v1171 = vsel %vm205, %v1167, %v1169
  %1175 = vrot.lane.b32.xlu0 %v1158, 126
  %v1176 = vpop.permute.xlu0 %1175
  %1177 = vrot.lane.b32.xlu0 %v1159, 126
  %v1178 = vpop.permute.xlu0 %1177
  %1179 = vrot.lane.b32.xlu0 %v1160, 126
  %v1180 = vpop.permute.xlu0 %1179
  %v1181 = vsel %vm221, %v1176, %v1178
  %v1182 = vsel %vm221, %v1178, %v1180
  %1186 = vrot.lane.b32.xlu0 %v1158, 108
  %v1187 = vpop.permute.xlu0 %1186
  %1188 = vrot.lane.b32.xlu0 %v1159, 108
  %v1189 = vpop.permute.xlu0 %1188
  %1190 = vrot.lane.b32.xlu0 %v1160, 108
  %v1191 = vpop.permute.xlu0 %1190
  %v1192 = vsel %vm236, %v1187, %v1189
  %v1193 = vsel %vm236, %v1189, %v1191
  %1197 = vrot.lane.b32.xlu0 %v1158, 107
  %v1198 = vpop.permute.xlu0 %1197
  %1199 = vrot.lane.b32.xlu0 %v1159, 107
  %v1200 = vpop.permute.xlu0 %1199
  %1201 = vrot.lane.b32.xlu0 %v1160, 107
  %v1202 = vpop.permute.xlu0 %1201
  %v1203 = vsel %vm251, %v1198, %v1200
  %v1204 = vsel %vm251, %v1200, %v1202
  %1208 = vrot.lane.b32.xlu0 %v1158, 106
  %v1209 = vpop.permute.xlu0 %1208
  %1210 = vrot.lane.b32.xlu0 %v1159, 106
  %v1211 = vpop.permute.xlu0 %1210
  %1212 = vrot.lane.b32.xlu0 %v1160, 106
  %v1213 = vpop.permute.xlu0 %1212
  %v1214 = vsel %vm266, %v1209, %v1211
  %v1215 = vsel %vm266, %v1211, %v1213
  %1219 = vrot.lane.b32.xlu0 %v1158, 88
  %v1220 = vpop.permute.xlu0 %1219
  %1221 = vrot.lane.b32.xlu0 %v1159, 88
  %v1222 = vpop.permute.xlu0 %1221
  %1223 = vrot.lane.b32.xlu0 %v1160, 88
  %v1224 = vpop.permute.xlu0 %1223
  %v1225 = vsel %vm281, %v1220, %v1222
  %v1226 = vsel %vm281, %v1222, %v1224
  %1230 = vrot.lane.b32.xlu0 %v1158, 87
  %v1231 = vpop.permute.xlu0 %1230
  %1232 = vrot.lane.b32.xlu0 %v1159, 87
  %v1233 = vpop.permute.xlu0 %1232
  %1234 = vrot.lane.b32.xlu0 %v1160, 87
  %v1235 = vpop.permute.xlu0 %1234
  %v1236 = vsel %vm296, %v1231, %v1233
  %v1237 = vsel %vm296, %v1233, %v1235
  %1241 = vrot.lane.b32.xlu0 %v1158, 86
  %v1242 = vpop.permute.xlu0 %1241
  %1243 = vrot.lane.b32.xlu0 %v1159, 86
  %v1244 = vpop.permute.xlu0 %1243
  %1245 = vrot.lane.b32.xlu0 %v1160, 86
  %v1246 = vpop.permute.xlu0 %1245
  %v1247 = vsel %vm311, %v1242, %v1244
  %v1248 = vsel %vm311, %v1244, %v1246
  %v1252 = vld [vmem:[%s5] sm:$0xff]
  %v1253 = vld [vmem:[%s6] sm:$0xff]
  %1255 = vset.pattern.permute.xlu0 0
  %1256 = vperm.xlu0 %1255, %v1253
  %v1257 = vpop.permute.xlu0 %1256
  %v1260 = vsel %vm607, %v1252, 0
  %1262 = vmatprep.subr.mxu0 0.0
  %1263 = vmatpush1.msra.mxu0 0.0
  %1264 = vmatprep.subr.mxu0 0.0
  %1265 = vmatpush1.msra.mxu0 0.0
  %1266 = vmatprep.subr.mxu0 0.0
  %1267 = vmatpush1.msra.mxu0 0.0
  %1268 = vmatprep.subr.mxu0 0.0
  %1269 = vmatpush1.msra.mxu0 0.0
  %1270 = vmatprep.subr.mxu0 0.0
  %1271 = vmatpush1.msra.mxu0 0.0
  %1272 = vmatprep.subr.mxu0 0.0
  %1273 = vmatpush1.msra.mxu0 0.0
  %1274 = vmatprep.subr.mxu0 0.0
  %1275 = vmatpush1.msra.mxu0 0.0
  %1276 = vmatprep.subr.mxu0 %v1248
  %1277 = vmatpush1.msra.mxu0 %v1247
  %1278 = vmatprep.subr.mxu0 %v1237
  %1279 = vmatpush1.msra.mxu0 %v1236
  %1280 = vmatprep.subr.mxu0 %v1226
  %1281 = vmatpush1.msra.mxu0 %v1225
  %1282 = vmatprep.subr.mxu0 %v1215
  %1283 = vmatpush1.msra.mxu0 %v1214
  %1284 = vmatprep.subr.mxu0 %v1204
  %1285 = vmatpush1.msra.mxu0 %v1203
  %1286 = vmatprep.subr.mxu0 %v1193
  %1287 = vmatpush1.msra.mxu0 %v1192
  %1288 = vmatprep.subr.mxu0 %v1182
  %1289 = vmatpush1.msra.mxu0 %v1181
  %1290 = vmatprep.subr.mxu0 %v1171
  %1291 = vmatpush1.msra.mxu0 %v1170
  %1292 = vmatprep.subr.mxu0 %v1159
  %1293 = vmatpush1.msra.mxu0 %v1158
  %1294 = vmatprep.subr.mxu0 0.0
  %1295 = vmatpush2.msra.mxu0 0.0
  %1296 = vmatprep.subr.mxu0 0.0
  %1297 = vmatpush2.msra.mxu0 0.0
  %1298 = vmatprep.subr.mxu0 0.0
  %1299 = vmatpush2.msra.mxu0 0.0
  %1300 = vmatprep.subr.mxu0 0.0
  %1301 = vmatpush2.msra.mxu0 0.0
  %1302 = vmatprep.subr.mxu0 0.0
  %1303 = vmatpush2.msra.mxu0 0.0
  %1304 = vmatprep.subr.mxu0 0.0
  %1305 = vmatpush2.msra.mxu0 0.0
  %1306 = vmatprep.subr.mxu0 0.0
  %1307 = vmatpush2.msra.mxu0 0.0
  %1308 = vmatprep.subr.mxu0 0.0
  %1309 = vmatpush2.msra.mxu0 0.0
  %1310 = vmatprep.subr.mxu0 0.0
  %1311 = vmatpush2.msra.mxu0 0.0
  %1312 = vmatprep.subr.mxu0 0.0
  %1313 = vmatpush2.msra.mxu0 0.0
  %1314 = vmatprep.subr.mxu0 0.0
  %1315 = vmatpush2.msra.mxu0 0.0
  %1316 = vmatprep.subr.mxu0 0.0
  %1317 = vmatpush2.msra.mxu0 0.0
  %1318 = vmatprep.subr.mxu0 0.0
  %1319 = vmatpush2.msra.mxu0 0.0
  %1320 = vmatprep.subr.mxu0 0.0
  %1321 = vmatpush2.msra.mxu0 0.0
  %1322 = vmatprep.subr.mxu0 0.0
  %1323 = vmatpush2.msra.mxu0 0.0
  %1324 = vmatprep.subr.mxu0 0.0
  %1325 = vmatpush2.msra.mxu0 0.0
  %1326 = vmatprep.mubr.f32.mxu0 0.0
  %1327 = vmatmul.mubr.f32.gmra.mxu0 %v1260
  %v1328 = vpop.f32.mrf.mxu0
  %v1329 = vadd.f32 %v1257, %v1328
  %v1330 = vpop.f32.mrf.mxu0
  %v1331 = vadd.f32 %v1257, %v1330
  %1332 = vdwg.mxu0
  %1333 = vmatprep.subr.mxu0 0.0
  %1334 = vmatpush1.msra.mxu0 0.0
  %1335 = vmatprep.subr.mxu0 0.0
  %1336 = vmatpush1.msra.mxu0 0.0
  %1337 = vmatprep.subr.mxu0 0.0
  %1338 = vmatpush1.msra.mxu0 0.0
  %1339 = vmatprep.subr.mxu0 0.0
  %1340 = vmatpush1.msra.mxu0 0.0
  %1341 = vmatprep.subr.mxu0 0.0
  %1342 = vmatpush1.msra.mxu0 0.0
  %1343 = vmatprep.subr.mxu0 0.0
  %1344 = vmatpush1.msra.mxu0 0.0
  %1345 = vmatprep.subr.mxu0 0.0
  %1346 = vmatpush1.msra.mxu0 0.0
  %1347 = vmatprep.subr.mxu0 0.0
  %1348 = vmatpush1.msra.mxu0 %v1246
  %1349 = vmatprep.subr.mxu0 0.0
  %1350 = vmatpush1.msra.mxu0 %v1235
  %1351 = vmatprep.subr.mxu0 0.0
  %1352 = vmatpush1.msra.mxu0 %v1224
  %1353 = vmatprep.subr.mxu0 0.0
  %1354 = vmatpush1.msra.mxu0 %v1213
  %1355 = vmatprep.subr.mxu0 0.0
  %1356 = vmatpush1.msra.mxu0 %v1202
  %1357 = vmatprep.subr.mxu0 0.0
  %1358 = vmatpush1.msra.mxu0 %v1191
  %1359 = vmatprep.subr.mxu0 0.0
  %1360 = vmatpush1.msra.mxu0 %v1180
  %1361 = vmatprep.subr.mxu0 0.0
  %1362 = vmatpush1.msra.mxu0 %v1169
  %1363 = vmatprep.subr.mxu0 0.0
  %1364 = vmatpush1.msra.mxu0 %v1160
  %1365 = vmatprep.subr.mxu0 0.0
  %1366 = vmatpush2.msra.mxu0 0.0
  %1367 = vmatprep.subr.mxu0 0.0
  %1368 = vmatpush2.msra.mxu0 0.0
  %1369 = vmatprep.subr.mxu0 0.0
  %1370 = vmatpush2.msra.mxu0 0.0
  %1371 = vmatprep.subr.mxu0 0.0
  %1372 = vmatpush2.msra.mxu0 0.0
  %1373 = vmatprep.subr.mxu0 0.0
  %1374 = vmatpush2.msra.mxu0 0.0
  %1375 = vmatprep.subr.mxu0 0.0
  %1376 = vmatpush2.msra.mxu0 0.0
  %1377 = vmatprep.subr.mxu0 0.0
  %1378 = vmatpush2.msra.mxu0 0.0
  %1379 = vmatprep.subr.mxu0 0.0
  %1380 = vmatpush2.msra.mxu0 0.0
  %1381 = vmatprep.subr.mxu0 0.0
  %1382 = vmatpush2.msra.mxu0 0.0
  %1383 = vmatprep.subr.mxu0 0.0
  %1384 = vmatpush2.msra.mxu0 0.0
  %1385 = vmatprep.subr.mxu0 0.0
  %1386 = vmatpush2.msra.mxu0 0.0
  %1387 = vmatprep.subr.mxu0 0.0
  %1388 = vmatpush2.msra.mxu0 0.0
  %1389 = vmatprep.subr.mxu0 0.0
  %1390 = vmatpush2.msra.mxu0 0.0
  %1391 = vmatprep.subr.mxu0 0.0
  %1392 = vmatpush2.msra.mxu0 0.0
  %1393 = vmatprep.subr.mxu0 0.0
  %1394 = vmatpush2.msra.mxu0 0.0
  %1395 = vmatprep.subr.mxu0 0.0
  %1396 = vmatpush2.msra.mxu0 0.0
  %1397 = vmatprep.mubr.f32.mxu0 0.0
  %1398 = vmatmul.mubr.f32.gmra.mxu0 %v1260
  %v1399 = vpop.f32.mrf.mxu0
  %v1400 = vadd.f32 %v1257, %v1399
  %v1401 = vpop.f32.mrf.mxu0
  %1402 = vdwg.mxu0
  %v1403 = vxor.u32 %v1329, 2147483648
  %v1404 = vxor.u32 %v1331, 2147483648
  %v1405 = vxor.u32 %v1400, 2147483648
  %v1406 = vmul.f32 %v1403, 1.442695
  %v1407 = vpow.pop %v1406
  %v1408 = vmul.f32 %v1404, 1.442695
  %v1409 = vpow.pop %v1408
  %v1410 = vmul.f32 %v1405, 1.442695
  %v1411 = vpow.pop %v1410
  %v1412 = vadd.f32 %v1407, 1.0
  %v1413 = vadd.f32 %v1409, 1.0
  %v1414 = vadd.f32 %v1411, 1.0
  %v1415 = vrcp.pop %v1412
  %v1416 = vmul.f32 1.0, %v1415
  %v1417 = vrcp.pop %v1413
  %v1418 = vmul.f32 1.0, %v1417
  %v1419 = vrcp.pop %v1414
  %v1420 = vmul.f32 1.0, %v1419
  %v1421 = vmul.f32 %v1329, %v1416
  %v1422 = vmul.f32 %v1331, %v1418
  %v1423 = vmul.f32 %v1400, %v1420
  %s1424 = scalar_lea.vmem %s7, 24
  %1425 = vst [vmem:[%s1424] sm:$0xff] %v1421
  %1426 = vst [vmem:[%s1424 + $0x8] sm:$0xff] %v1422
  %1427 = vst.msk [vmem:[%s1424 + $0x10] sm:$0xff] %vm775, %v1423
  // Predicated region
  $region30: #{my_block_forward.1} parent=0 // pred_check
    _
  $region31: #{my_block_forward.1} parent=0 // pred_check_branch
    %1429 = sbr.rel (0) target = $region33
  $region32: #{my_block_forward.1} parent=0 // pred_region
    _
  $region33: #{my_block_forward.1} parent=0 // pred_fallthru
    _
  // Predicated region
  $region34: #{my_block_forward.1} parent=0 // pred_check
    _
  $region35: #{my_block_forward.1} parent=0 // pred_check_branch
    %1431 = sbr.rel (0) target = $region37
  $region36: #{my_block_forward.1} parent=0 // pred_region
    _
  $region37: #{my_block_forward.1} parent=0 // pred_fallthru
    _

</llo_original>
